<compile_context>
chip_gen: v6e
topology: v6e:2x2x1
jax: 0.10.0
libtpu: 0.0.40
codegen_flags: <defaults>
</compile_context>

<pallas_src>
import jax
import jax.numpy as jnp
from jax import lax
from jax.experimental import pallas as pl
from jax.experimental.pallas import tpu as pltpu


RNN_IN = 2        # (time-to-maturity, price)
RNN_HIDDEN = 10
FFN_HIDDEN = 10
FFN_OUT = 1

B_TILE = 128      # Monte-Carlo path tile -> lane axis (multiple of 128)


def _hedge_rnn_kernel(xw_ref, whh_ref, w1_ref, b1_ref, w2_ref, b2_ref,
                      out_ref, h_hist_ref):
    """Recurrence + post-hoc FFN; batch lives on the lane axis.

    xw_ref    : (T, H, Bt)   precomputed x @ W_ih^T + b_ih + b_hh (time-major)
    whh_ref   : (H, H)       column-form recurrent weight (torch W_hh)
    w1_ref    : (F1, H)      column-form FFN layer-1 weight
    b1_ref    : (F1, 1)
    w2_ref    : (1, F1)      column-form FFN layer-2 weight
    b2_ref    : (1, 1)
    out_ref   : (T, Bt)      hedge ratio per (step, path) - lane dense
    h_hist_ref: (T, H, Bt)   VMEM scratch: hidden-state history
    """
    t_steps, hidden, b_tile = xw_ref.shape

    # Hoist weight load out of the sequential loop (no per-step re-load).
    whh = whh_ref[...]

    def step(t, h):
        h_new = jnp.tanh(
            xw_ref[t]
            + jnp.dot(whh, h, preferred_element_type=jnp.float32))
        h_hist_ref[t] = h_new
        return h_new

    h0 = jnp.zeros((hidden, b_tile), dtype=jnp.float32)
    # Short static T -> fully unroll so tanh (EUP) / h-update (MXU/VPU) of
    # adjacent steps can co-issue; fall back to a rolled loop for long T.
    lax.fori_loop(0, t_steps, step, h0, unroll=(t_steps <= 64))

    # FFN applied once over the whole history: two T-batched lane-dense
    # matmuls instead of 2*T tiny ones on the serial critical path.
    h_all = h_hist_ref[...]                                        # (T, H, Bt)
    w1b = jnp.broadcast_to(w1_ref[...][None], (t_steps, FFN_HIDDEN, hidden))
    z = jnp.einsum('tfh,thb->tfb', w1b, h_all,
                   preferred_element_type=jnp.float32) + b1_ref[...][None]
    z = jnp.maximum(z, 0.0)                                        # (T, F1, Bt)
    w2b = jnp.broadcast_to(w2_ref[...][None], (t_steps, FFN_OUT, FFN_HIDDEN))
    y = jnp.einsum('tof,tfb->tob', w2b, z,
                   preferred_element_type=jnp.float32) + b2_ref[...][None]
    out_ref[...] = y[:, 0, :]                                      # (T, Bt)


@jax.jit
def hedge_forward(x_btd, params):
    """Pallas-backed equivalent of `self.hedge(x)` for x of shape (B, T, 2).

    Returns (B, T, 1), matching torch's batch_first RNN + FFN output.
    """
    wih, whh, brnn, w1, b1, w2, b2 = params
    x = x_btd.astype(jnp.float32)
    batch, t_steps, _ = x.shape

    # Hoist the (non-recurrent) input projection out of the kernel:
    # one (B*T, 2) @ (2, H) matmul with the RNN biases folded in.
    xw = jnp.einsum('btk,kh->bth', x, wih) + brnn                  # (B, T, H)
    xw = jnp.transpose(xw, (1, 2, 0))                              # (T, H, B)

    b_pad = pl.cdiv(batch, B_TILE) * B_TILE
    if b_pad != batch:
        xw = jnp.pad(xw, ((0, 0), (0, 0), (0, b_pad - batch)))

    # Column-form (batch-on-lane) weights.
    whh_c = whh.T            # (H, H)
    w1_c = w1.T              # (F1, H)
    b1_c = b1.T              # (F1, 1)
    w2_c = w2.T              # (1, F1)
    b2_c = b2                # (1, 1)

    out_tb = pl.pallas_call(
        _hedge_rnn_kernel,
        out_shape=jax.ShapeDtypeStruct((t_steps, b_pad), jnp.float32),
        grid=(b_pad // B_TILE,),
        in_specs=[
            pl.BlockSpec((t_steps, RNN_HIDDEN, B_TILE), lambda i: (0, 0, i)),
            pl.BlockSpec((RNN_HIDDEN, RNN_HIDDEN), lambda i: (0, 0)),
            pl.BlockSpec((FFN_HIDDEN, RNN_HIDDEN), lambda i: (0, 0)),
            pl.BlockSpec((FFN_HIDDEN, 1), lambda i: (0, 0)),
            pl.BlockSpec((FFN_OUT, FFN_HIDDEN), lambda i: (0, 0)),
            pl.BlockSpec((FFN_OUT, 1), lambda i: (0, 0)),
        ],
        out_specs=pl.BlockSpec((t_steps, B_TILE), lambda i: (0, i)),
        scratch_shapes=[pltpu.VMEM((t_steps, RNN_HIDDEN, B_TILE), jnp.float32)],
        compiler_params=pltpu.CompilerParams(
            dimension_semantics=("parallel",)),
    )(xw, whh_c, w1_c, b1_c, w2_c, b2_c)

    out = out_tb[:, :batch]                                        # (T, B)
    return jnp.transpose(out, (1, 0))[..., None]                   # (B, T, 1)


def init_params(key):
    """Deterministic init of hedge-RNN weights (shapes from the module __init__)."""
    k = jax.random.split(key, 8)
    scale = 0.3
    wih = scale * jax.random.normal(k[0], (RNN_IN, RNN_HIDDEN), jnp.float32)
    whh = scale * jax.random.normal(k[1], (RNN_HIDDEN, RNN_HIDDEN), jnp.float32)
    brnn = scale * jax.random.normal(k[2], (1, RNN_HIDDEN), jnp.float32)
    w1 = scale * jax.random.normal(k[3], (RNN_HIDDEN, FFN_HIDDEN), jnp.float32)
    b1 = scale * jax.random.normal(k[4], (1, FFN_HIDDEN), jnp.float32)
    w2 = scale * jax.random.normal(k[5], (FFN_HIDDEN, FFN_OUT), jnp.float32)
    b2 = scale * jax.random.normal(k[6], (1, FFN_OUT), jnp.float32)
    v_init = jnp.float32(1000.0)  # nn.Parameter(torch.tensor(1000.0))
    return (wih, whh, brnn, w1, b1, w2, b2), v_init


def reference_forward(x_btd, params):
    """Plain-JAX reference of the same RNN + FFN for correctness checking."""
    wih, whh, brnn, w1, b1, w2, b2 = params
    x_tbd = jnp.transpose(x_btd, (1, 0, 2)).astype(jnp.float32)
    batch = x_tbd.shape[1]

    def step(h, x_t):
        h_new = jnp.tanh(x_t @ wih + h @ whh + brnn)
        z = jnp.maximum(h_new @ w1 + b1, 0.0)
        y = z @ w2 + b2
        return h_new, y

    h0 = jnp.zeros((batch, RNN_HIDDEN), jnp.float32)
    _, ys = lax.scan(step, h0, x_tbd)            # (T, B, 1)
    return jnp.transpose(ys, (1, 0, 2))


if __name__ == "__main__":
    key = jax.random.PRNGKey(0)
    params, v_init = init_params(key)

    # Small shapes: batch=8 paths, n_steps=8, features = (time, price/p0).
    batch_size, n_steps = 8, 8
    p0 = 100.0
    kx = jax.random.fold_in(key, 1)
    ts = jnp.linspace(0.0, 1.0, n_steps, dtype=jnp.float32)
    prices = p0 * jnp.exp(0.2 * jnp.cumsum(
        0.1 * jax.random.normal(kx, (batch_size, n_steps), jnp.float32), axis=1))
    time_feat = jnp.broadcast_to(ts[None, :], (batch_size, n_steps))
    x = jnp.stack([time_feat, prices / p0], axis=-1)   # (B, T, 2)

    hedge = jax.block_until_ready(hedge_forward(x, params))
    ref = reference_forward(x, params)

    assert hedge.shape == (batch_size, n_steps, 1)
    assert jnp.allclose(hedge, ref, atol=1e-5, rtol=1e-5), "mismatch vs reference"

    # v_init participates as the initial portfolio value in subclasses' forward.
    _ = v_init

    print("KERNEL_OK")
</pallas_src>

<mosaic_0001>
module attributes {stable_mosaic.version = 11 : i64} {
  func.func @_hedge_rnn_kernel(%arg0: i32, %arg1: memref<8x10x128xf32, #tpu.memory_space<vmem>>, %arg2: memref<10x10xf32, #tpu.memory_space<vmem>>, %arg3: memref<10x10xf32, #tpu.memory_space<vmem>>, %arg4: memref<10x1xf32, #tpu.memory_space<vmem>>, %arg5: memref<1x10xf32, #tpu.memory_space<vmem>>, %arg6: memref<1x1xf32, #tpu.memory_space<vmem>>, %arg7: memref<8x128xf32, #tpu.memory_space<vmem>>, %arg8: memref<8x10x128xf32, #tpu.memory_space<vmem>>) attributes {dimension_semantics = [#tpu.dimension_semantics<parallel>], iteration_bounds = array<i64: 1>, scalar_prefetch = 0 : i64, scratch_operands = 1 : i64, tpu.core_type = #tpu.core_type<tc>, window_params = [{transform_indices = @transform_0, window_bounds = array<i64: 8, 10, 128>}, {pipeline_mode = #tpu.pipeline_mode<synchronous>, transform_indices = @transform_1, window_bounds = array<i64: 10, 10>}, {pipeline_mode = #tpu.pipeline_mode<synchronous>, transform_indices = @transform_2, window_bounds = array<i64: 10, 10>}, {pipeline_mode = #tpu.pipeline_mode<synchronous>, transform_indices = @transform_3, window_bounds = array<i64: 10, 1>}, {pipeline_mode = #tpu.pipeline_mode<synchronous>, transform_indices = @transform_4, window_bounds = array<i64: 1, 10>}, {pipeline_mode = #tpu.pipeline_mode<synchronous>, transform_indices = @transform_5, window_bounds = array<i64: 1, 1>}, {transform_indices = @transform_6, window_bounds = array<i64: 8, 128>}]} {
    %c0 = arith.constant 0 : index
    %c0_0 = arith.constant 0 : index
    %0 = vector.load %arg2[%c0, %c0_0] : memref<10x10xf32, #tpu.memory_space<vmem>>, vector<10x10xf32>
    %cst = arith.constant 0.000000e+00 : f32
    %1 = vector.broadcast %cst : f32 to vector<10x128xf32>
    %c0_i32 = arith.constant 0 : i32
    %2 = arith.index_cast %c0_i32 : i32 to index
    %c0_1 = arith.constant 0 : index
    %c0_2 = arith.constant 0 : index
    %3 = vector.load %arg1[%2, %c0_1, %c0_2] : memref<8x10x128xf32, #tpu.memory_space<vmem>>, vector<1x10x128xf32>
    %4 = vector.shape_cast %3 : vector<1x10x128xf32> to vector<10x128xf32>
    %cst_3 = arith.constant dense<0.000000e+00> : vector<10x128xf32>
    %5 = tpu.matmul %0, %1, %cst_3 {dimension_numbers = #tpu.dot_dimension_numbers<[1], [0], [0], [1], [0, 0, 1, 1], [], []>} : vector<10x10xf32>, vector<10x128xf32>, vector<10x128xf32> -> vector<10x128xf32>
    %6 = arith.addf %4, %5 : vector<10x128xf32>
    %7 = math.tanh %6 : vector<10x128xf32>
    %8 = arith.index_cast %c0_i32 : i32 to index
    %c0_4 = arith.constant 0 : index
    %c0_5 = arith.constant 0 : index
    %9 = vector.load %arg8[%8, %c0_4, %c0_5] : memref<8x10x128xf32, #tpu.memory_space<vmem>>, vector<1x10x128xf32>
    %10 = vector.shape_cast %9 : vector<1x10x128xf32> to vector<10x128xf32>
    %11 = vector.shape_cast %7 : vector<10x128xf32> to vector<1x10x128xf32>
    tpu.vector_store %arg8[%8, %c0_4, %c0_5], %11 {strides = array<i32>} : memref<8x10x128xf32, #tpu.memory_space<vmem>>, vector<1x10x128xf32>,
    %c1_i32 = arith.constant 1 : i32
    %12 = arith.index_cast %c1_i32 : i32 to index
    %c0_6 = arith.constant 0 : index
    %c0_7 = arith.constant 0 : index
    %13 = vector.load %arg1[%12, %c0_6, %c0_7] : memref<8x10x128xf32, #tpu.memory_space<vmem>>, vector<1x10x128xf32>
    %14 = vector.shape_cast %13 : vector<1x10x128xf32> to vector<10x128xf32>
    %cst_8 = arith.constant dense<0.000000e+00> : vector<10x128xf32>
    %15 = tpu.matmul %0, %7, %cst_8 {dimension_numbers = #tpu.dot_dimension_numbers<[1], [0], [0], [1], [0, 0, 1, 1], [], []>} : vector<10x10xf32>, vector<10x128xf32>, vector<10x128xf32> -> vector<10x128xf32>
    %16 = arith.addf %14, %15 : vector<10x128xf32>
    %17 = math.tanh %16 : vector<10x128xf32>
    %18 = arith.index_cast %c1_i32 : i32 to index
    %c0_9 = arith.constant 0 : index
    %c0_10 = arith.constant 0 : index
    %19 = vector.load %arg8[%18, %c0_9, %c0_10] : memref<8x10x128xf32, #tpu.memory_space<vmem>>, vector<1x10x128xf32>
    %20 = vector.shape_cast %19 : vector<1x10x128xf32> to vector<10x128xf32>
    %21 = vector.shape_cast %17 : vector<10x128xf32> to vector<1x10x128xf32>
    tpu.vector_store %arg8[%18, %c0_9, %c0_10], %21 {strides = array<i32>} : memref<8x10x128xf32, #tpu.memory_space<vmem>>, vector<1x10x128xf32>,
    %c2_i32 = arith.constant 2 : i32
    %22 = arith.index_cast %c2_i32 : i32 to index
    %c0_11 = arith.constant 0 : index
    %c0_12 = arith.constant 0 : index
    %23 = vector.load %arg1[%22, %c0_11, %c0_12] : memref<8x10x128xf32, #tpu.memory_space<vmem>>, vector<1x10x128xf32>
    %24 = vector.shape_cast %23 : vector<1x10x128xf32> to vector<10x128xf32>
    %cst_13 = arith.constant dense<0.000000e+00> : vector<10x128xf32>
    %25 = tpu.matmul %0, %17, %cst_13 {dimension_numbers = #tpu.dot_dimension_numbers<[1], [0], [0], [1], [0, 0, 1, 1], [], []>} : vector<10x10xf32>, vector<10x128xf32>, vector<10x128xf32> -> vector<10x128xf32>
    %26 = arith.addf %24, %25 : vector<10x128xf32>
    %27 = math.tanh %26 : vector<10x128xf32>
    %28 = arith.index_cast %c2_i32 : i32 to index
    %c0_14 = arith.constant 0 : index
    %c0_15 = arith.constant 0 : index
    %29 = vector.load %arg8[%28, %c0_14, %c0_15] : memref<8x10x128xf32, #tpu.memory_space<vmem>>, vector<1x10x128xf32>
    %30 = vector.shape_cast %29 : vector<1x10x128xf32> to vector<10x128xf32>
    %31 = vector.shape_cast %27 : vector<10x128xf32> to vector<1x10x128xf32>
    tpu.vector_store %arg8[%28, %c0_14, %c0_15], %31 {strides = array<i32>} : memref<8x10x128xf32, #tpu.memory_space<vmem>>, vector<1x10x128xf32>,
    %c3_i32 = arith.constant 3 : i32
    %32 = arith.index_cast %c3_i32 : i32 to index
    %c0_16 = arith.constant 0 : index
    %c0_17 = arith.constant 0 : index
    %33 = vector.load %arg1[%32, %c0_16, %c0_17] : memref<8x10x128xf32, #tpu.memory_space<vmem>>, vector<1x10x128xf32>
    %34 = vector.shape_cast %33 : vector<1x10x128xf32> to vector<10x128xf32>
    %cst_18 = arith.constant dense<0.000000e+00> : vector<10x128xf32>
    %35 = tpu.matmul %0, %27, %cst_18 {dimension_numbers = #tpu.dot_dimension_numbers<[1], [0], [0], [1], [0, 0, 1, 1], [], []>} : vector<10x10xf32>, vector<10x128xf32>, vector<10x128xf32> -> vector<10x128xf32>
    %36 = arith.addf %34, %35 : vector<10x128xf32>
    %37 = math.tanh %36 : vector<10x128xf32>
    %38 = arith.index_cast %c3_i32 : i32 to index
    %c0_19 = arith.constant 0 : index
    %c0_20 = arith.constant 0 : index
    %39 = vector.load %arg8[%38, %c0_19, %c0_20] : memref<8x10x128xf32, #tpu.memory_space<vmem>>, vector<1x10x128xf32>
    %40 = vector.shape_cast %39 : vector<1x10x128xf32> to vector<10x128xf32>
    %41 = vector.shape_cast %37 : vector<10x128xf32> to vector<1x10x128xf32>
    tpu.vector_store %arg8[%38, %c0_19, %c0_20], %41 {strides = array<i32>} : memref<8x10x128xf32, #tpu.memory_space<vmem>>, vector<1x10x128xf32>,
    %c4_i32 = arith.constant 4 : i32
    %42 = arith.index_cast %c4_i32 : i32 to index
    %c0_21 = arith.constant 0 : index
    %c0_22 = arith.constant 0 : index
    %43 = vector.load %arg1[%42, %c0_21, %c0_22] : memref<8x10x128xf32, #tpu.memory_space<vmem>>, vector<1x10x128xf32>
    %44 = vector.shape_cast %43 : vector<1x10x128xf32> to vector<10x128xf32>
    %cst_23 = arith.constant dense<0.000000e+00> : vector<10x128xf32>
    %45 = tpu.matmul %0, %37, %cst_23 {dimension_numbers = #tpu.dot_dimension_numbers<[1], [0], [0], [1], [0, 0, 1, 1], [], []>} : vector<10x10xf32>, vector<10x128xf32>, vector<10x128xf32> -> vector<10x128xf32>
    %46 = arith.addf %44, %45 : vector<10x128xf32>
    %47 = math.tanh %46 : vector<10x128xf32>
    %48 = arith.index_cast %c4_i32 : i32 to index
    %c0_24 = arith.constant 0 : index
    %c0_25 = arith.constant 0 : index
    %49 = vector.load %arg8[%48, %c0_24, %c0_25] : memref<8x10x128xf32, #tpu.memory_space<vmem>>, vector<1x10x128xf32>
    %50 = vector.shape_cast %49 : vector<1x10x128xf32> to vector<10x128xf32>
    %51 = vector.shape_cast %47 : vector<10x128xf32> to vector<1x10x128xf32>
    tpu.vector_store %arg8[%48, %c0_24, %c0_25], %51 {strides = array<i32>} : memref<8x10x128xf32, #tpu.memory_space<vmem>>, vector<1x10x128xf32>,
    %c5_i32 = arith.constant 5 : i32
    %52 = arith.index_cast %c5_i32 : i32 to index
    %c0_26 = arith.constant 0 : index
    %c0_27 = arith.constant 0 : index
    %53 = vector.load %arg1[%52, %c0_26, %c0_27] : memref<8x10x128xf32, #tpu.memory_space<vmem>>, vector<1x10x128xf32>
    %54 = vector.shape_cast %53 : vector<1x10x128xf32> to vector<10x128xf32>
    %cst_28 = arith.constant dense<0.000000e+00> : vector<10x128xf32>
    %55 = tpu.matmul %0, %47, %cst_28 {dimension_numbers = #tpu.dot_dimension_numbers<[1], [0], [0], [1], [0, 0, 1, 1], [], []>} : vector<10x10xf32>, vector<10x128xf32>, vector<10x128xf32> -> vector<10x128xf32>
    %56 = arith.addf %54, %55 : vector<10x128xf32>
    %57 = math.tanh %56 : vector<10x128xf32>
    %58 = arith.index_cast %c5_i32 : i32 to index
    %c0_29 = arith.constant 0 : index
    %c0_30 = arith.constant 0 : index
    %59 = vector.load %arg8[%58, %c0_29, %c0_30] : memref<8x10x128xf32, #tpu.memory_space<vmem>>, vector<1x10x128xf32>
    %60 = vector.shape_cast %59 : vector<1x10x128xf32> to vector<10x128xf32>
    %61 = vector.shape_cast %57 : vector<10x128xf32> to vector<1x10x128xf32>
    tpu.vector_store %arg8[%58, %c0_29, %c0_30], %61 {strides = array<i32>} : memref<8x10x128xf32, #tpu.memory_space<vmem>>, vector<1x10x128xf32>,
    %c6_i32 = arith.constant 6 : i32
    %62 = arith.index_cast %c6_i32 : i32 to index
    %c0_31 = arith.constant 0 : index
    %c0_32 = arith.constant 0 : index
    %63 = vector.load %arg1[%62, %c0_31, %c0_32] : memref<8x10x128xf32, #tpu.memory_space<vmem>>, vector<1x10x128xf32>
    %64 = vector.shape_cast %63 : vector<1x10x128xf32> to vector<10x128xf32>
    %cst_33 = arith.constant dense<0.000000e+00> : vector<10x128xf32>
    %65 = tpu.matmul %0, %57, %cst_33 {dimension_numbers = #tpu.dot_dimension_numbers<[1], [0], [0], [1], [0, 0, 1, 1], [], []>} : vector<10x10xf32>, vector<10x128xf32>, vector<10x128xf32> -> vector<10x128xf32>
    %66 = arith.addf %64, %65 : vector<10x128xf32>
    %67 = math.tanh %66 : vector<10x128xf32>
    %68 = arith.index_cast %c6_i32 : i32 to index
    %c0_34 = arith.constant 0 : index
    %c0_35 = arith.constant 0 : index
    %69 = vector.load %arg8[%68, %c0_34, %c0_35] : memref<8x10x128xf32, #tpu.memory_space<vmem>>, vector<1x10x128xf32>
    %70 = vector.shape_cast %69 : vector<1x10x128xf32> to vector<10x128xf32>
    %71 = vector.shape_cast %67 : vector<10x128xf32> to vector<1x10x128xf32>
    tpu.vector_store %arg8[%68, %c0_34, %c0_35], %71 {strides = array<i32>} : memref<8x10x128xf32, #tpu.memory_space<vmem>>, vector<1x10x128xf32>,
    %c7_i32 = arith.constant 7 : i32
    %72 = arith.index_cast %c7_i32 : i32 to index
    %c0_36 = arith.constant 0 : index
    %c0_37 = arith.constant 0 : index
    %73 = vector.load %arg1[%72, %c0_36, %c0_37] : memref<8x10x128xf32, #tpu.memory_space<vmem>>, vector<1x10x128xf32>
    %74 = vector.shape_cast %73 : vector<1x10x128xf32> to vector<10x128xf32>
    %cst_38 = arith.constant dense<0.000000e+00> : vector<10x128xf32>
    %75 = tpu.matmul %0, %67, %cst_38 {dimension_numbers = #tpu.dot_dimension_numbers<[1], [0], [0], [1], [0, 0, 1, 1], [], []>} : vector<10x10xf32>, vector<10x128xf32>, vector<10x128xf32> -> vector<10x128xf32>
    %76 = arith.addf %74, %75 : vector<10x128xf32>
    %77 = math.tanh %76 : vector<10x128xf32>
    %78 = arith.index_cast %c7_i32 : i32 to index
    %c0_39 = arith.constant 0 : index
    %c0_40 = arith.constant 0 : index
    %79 = vector.load %arg8[%78, %c0_39, %c0_40] : memref<8x10x128xf32, #tpu.memory_space<vmem>>, vector<1x10x128xf32>
    %80 = vector.shape_cast %79 : vector<1x10x128xf32> to vector<10x128xf32>
    %81 = vector.shape_cast %77 : vector<10x128xf32> to vector<1x10x128xf32>
    tpu.vector_store %arg8[%78, %c0_39, %c0_40], %81 {strides = array<i32>} : memref<8x10x128xf32, #tpu.memory_space<vmem>>, vector<1x10x128xf32>,
    %c8_i32 = arith.constant 8 : i32
    %c0_41 = arith.constant 0 : index
    %c0_42 = arith.constant 0 : index
    %c0_43 = arith.constant 0 : index
    %82 = vector.load %arg8[%c0_41, %c0_42, %c0_43] : memref<8x10x128xf32, #tpu.memory_space<vmem>>, vector<8x10x128xf32>
    %c0_44 = arith.constant 0 : index
    %c0_45 = arith.constant 0 : index
    %83 = vector.load %arg3[%c0_44, %c0_45] : memref<10x10xf32, #tpu.memory_space<vmem>>, vector<10x10xf32>
    %84 = vector.shape_cast %83 : vector<10x10xf32> to vector<1x10x10xf32>
    %85 = vector.shape_cast %84 : vector<1x10x10xf32> to vector<1x10x10xf32>
    %86 = vector.broadcast %85 : vector<1x10x10xf32> to vector<8x10x10xf32>
    "tpu.trace_start"() <{level = 10 : i32, message = "tfh,thb->tfb"}> : () -> ()
    %cst_46 = arith.constant dense<0.000000e+00> : vector<8x10x128xf32>
    %87 = tpu.matmul %86, %82, %cst_46 {dimension_numbers = #tpu.dot_dimension_numbers<[2], [1], [1], [2], [0, 0, 0, 1, 1, 2], [0], [0]>} : vector<8x10x10xf32>, vector<8x10x128xf32>, vector<8x10x128xf32> -> vector<8x10x128xf32>
    "tpu.trace_stop"() : () -> ()
    %c0_47 = arith.constant 0 : index
    %c0_48 = arith.constant 0 : index
    %88 = vector.load %arg4[%c0_47, %c0_48] : memref<10x1xf32, #tpu.memory_space<vmem>>, vector<10x1xf32>
    %89 = vector.shape_cast %88 : vector<10x1xf32> to vector<1x10x1xf32>
    %90 = vector.broadcast %89 : vector<1x10x1xf32> to vector<8x10x128xf32>
    %91 = arith.addf %87, %90 : vector<8x10x128xf32>
    %cst_49 = arith.constant 0.000000e+00 : f32
    %92 = vector.broadcast %cst_49 : f32 to vector<8x10x128xf32>
    %93 = arith.maximumf %91, %92 : vector<8x10x128xf32>
    %c0_50 = arith.constant 0 : index
    %c0_51 = arith.constant 0 : index
    %94 = vector.load %arg5[%c0_50, %c0_51] : memref<1x10xf32, #tpu.memory_space<vmem>>, vector<1x10xf32>
    %95 = vector.shape_cast %94 : vector<1x10xf32> to vector<1x1x10xf32>
    %96 = vector.shape_cast %95 : vector<1x1x10xf32> to vector<1x1x10xf32>
    %97 = vector.broadcast %96 : vector<1x1x10xf32> to vector<8x1x10xf32>
    "tpu.trace_start"() <{level = 10 : i32, message = "tof,tfb->tob"}> : () -> ()
    %cst_52 = arith.constant dense<0.000000e+00> : vector<8x1x128xf32>
    %98 = tpu.matmul %97, %93, %cst_52 {dimension_numbers = #tpu.dot_dimension_numbers<[2], [1], [1], [2], [0, 0, 0, 1, 1, 2], [0], [0]>} : vector<8x1x10xf32>, vector<8x10x128xf32>, vector<8x1x128xf32> -> vector<8x1x128xf32>
    "tpu.trace_stop"() : () -> ()
    %c0_53 = arith.constant 0 : index
    %c0_54 = arith.constant 0 : index
    %99 = vector.load %arg6[%c0_53, %c0_54] : memref<1x1xf32, #tpu.memory_space<vmem>>, vector<1x1xf32>
    %100 = vector.shape_cast %99 : vector<1x1xf32> to vector<1x1x1xf32>
    %101 = vector.broadcast %100 : vector<1x1x1xf32> to vector<8x1x128xf32>
    %102 = arith.addf %98, %101 : vector<8x1x128xf32>
    %103 = vector.shape_cast %102 : vector<8x1x128xf32> to vector<8x128xf32>
    %c0_55 = arith.constant 0 : index
    %c0_56 = arith.constant 0 : index
    %104 = vector.load %arg7[%c0_55, %c0_56] : memref<8x128xf32, #tpu.memory_space<vmem>>, vector<8x128xf32>
    tpu.vector_store %arg7[%c0_55, %c0_56], %103 {strides = array<i32>} : memref<8x128xf32, #tpu.memory_space<vmem>>, vector<8x128xf32>,
    return
  }
  func.func @transform_0(%arg0: i32) -> (i32, i32, i32) {
    %c0_i32 = arith.constant 0 : i32
    %c0_i32_0 = arith.constant 0 : i32
    %c0_i32_1 = arith.constant 0 : i32
    return %c0_i32, %c0_i32_0, %arg0 : i32, i32, i32
  }
  func.func @transform_1(%arg0: i32) -> (i32, i32) {
    %c0_i32 = arith.constant 0 : i32
    %c0_i32_0 = arith.constant 0 : i32
    %c0_i32_1 = arith.constant 0 : i32
    return %c0_i32, %c0_i32_0 : i32, i32
  }
  func.func @transform_2(%arg0: i32) -> (i32, i32) {
    %c0_i32 = arith.constant 0 : i32
    %c0_i32_0 = arith.constant 0 : i32
    %c0_i32_1 = arith.constant 0 : i32
    return %c0_i32, %c0_i32_0 : i32, i32
  }
  func.func @transform_3(%arg0: i32) -> (i32, i32) {
    %c0_i32 = arith.constant 0 : i32
    %c0_i32_0 = arith.constant 0 : i32
    %c0_i32_1 = arith.constant 0 : i32
    return %c0_i32, %c0_i32_0 : i32, i32
  }
  func.func @transform_4(%arg0: i32) -> (i32, i32) {
    %c0_i32 = arith.constant 0 : i32
    %c0_i32_0 = arith.constant 0 : i32
    %c0_i32_1 = arith.constant 0 : i32
    return %c0_i32, %c0_i32_0 : i32, i32
  }
  func.func @transform_5(%arg0: i32) -> (i32, i32) {
    %c0_i32 = arith.constant 0 : i32
    %c0_i32_0 = arith.constant 0 : i32
    %c0_i32_1 = arith.constant 0 : i32
    return %c0_i32, %c0_i32_0 : i32, i32
  }
  func.func @transform_6(%arg0: i32) -> (i32, i32) {
    %c0_i32 = arith.constant 0 : i32
    %c0_i32_0 = arith.constant 0 : i32
    return %c0_i32, %arg0 : i32, i32
  }
}

</mosaic_0001>

<llo_original>
// kernel: hedge_forward.1
$region0: #{hedge_forward.1}
  #allocation0 [shape = 'u32[]', space=smem, size = 0x4, offset = 0x4, fixed_abs, tag = 'smem constant byte address 0x4 - core index']
  #allocation1 [shape = 'u32[144,128]{1,0:T(1,128)}', space=vmem, size = 0x12000, scoped, tag = 'internal scratch']
  #allocation2 [shape = 'f32[8,10,128]{2,1,0:T(8,128)}', space=vmem, size = 0x10000, scoped, tag = 'scratch operand']
  #allocation3 [shape = 'f32[1,1]{1,0:T(1,128)S(1)}', space=vmem, size = 0x200, scoped, tag = 'scoped memory for hedge_forward.1']
  %s0 = inlined_call_operand.vmem [shape: f32[8,10,128], index: 0, kind: input, shape index: {}]
  %s1 = inlined_call_operand.vmem [shape: f32[10,10], index: 1, kind: input, shape index: {}]
  %s2 = inlined_call_operand.vmem [shape: f32[10,10], index: 2, kind: input, shape index: {}]
  %s3 = inlined_call_operand.vmem [shape: f32[10,1], index: 3, kind: input, shape index: {}]
  %s4 = inlined_call_operand.vmem [shape: f32[1,10], index: 4, kind: input, shape index: {}]
  %s5 = inlined_call_operand.<no memory space> [shape: f32[1,1], index: 5, kind: input, shape index: {}]
  %s6 = inlined_call_operand.vmem [shape: f32[8,128], index: 6, kind: output, shape index: {}]
  %s7 = sld [smem:[#allocation0]]
  $region34: #{hedge_forward.1} parent=0
    _
  %s9 = ssub.s32 1, %s7
  %s10 = scalar_select 0, %s9, %s7
  %v11 = vstv %s5
  %12 = vst [vmem:[#allocation3] sm:$0x1] %v11
  // Predicated region
  $region2: #{hedge_forward.1} parent=0 // pred_check
    _
  $region3: #{hedge_forward.1} parent=0 // pred_check_branch
    %14 = sbr.rel (0) target = $region5
  $region4: #{hedge_forward.1} parent=0 // pred_region
    _
  $region5: #{hedge_forward.1} parent=0 // pred_fallthru
    _
  // Predicated region
  $region6: #{hedge_forward.1} parent=0 // pred_check
    _
  $region7: #{hedge_forward.1} parent=0 // pred_check_branch
    %16 = sbr.rel (0) target = $region9
  $region8: #{hedge_forward.1} parent=0 // pred_region
    _
  $region9: #{hedge_forward.1} parent=0 // pred_fallthru
    _
  // Predicated region
  $region10: #{hedge_forward.1} parent=0 // pred_check
    _
  $region11: #{hedge_forward.1} parent=0 // pred_check_branch
    %18 = sbr.rel (0) target = $region13
  $region12: #{hedge_forward.1} parent=0 // pred_region
    _
  $region13: #{hedge_forward.1} parent=0 // pred_fallthru
    _
  // Predicated region
  $region14: #{hedge_forward.1} parent=0 // pred_check
    _
  $region15: #{hedge_forward.1} parent=0 // pred_check_branch
    %20 = sbr.rel (0) target = $region17
  $region16: #{hedge_forward.1} parent=0 // pred_region
    _
  $region17: #{hedge_forward.1} parent=0 // pred_fallthru
    _
  // Predicated region
  $region18: #{hedge_forward.1} parent=0 // pred_check
    _
  $region19: #{hedge_forward.1} parent=0 // pred_check_branch
    %22 = sbr.rel (0) target = $region21
  $region20: #{hedge_forward.1} parent=0 // pred_region
    _
  $region21: #{hedge_forward.1} parent=0 // pred_fallthru
    _
  // Predicated region
  $region22: #{hedge_forward.1} parent=0 // pred_check
    _
  $region23: #{hedge_forward.1} parent=0 // pred_check_branch
    %24 = sbr.rel (0) target = $region25
  $region24: #{hedge_forward.1} parent=0 // pred_region
    _
  $region25: #{hedge_forward.1} parent=0 // pred_fallthru
    _
  %v25 = vld [vmem:[%s1] sm:$0xff]
  %v26 = vld [vmem:[%s1 + $0x8] sm:$0x3]
  %v27 = vld [vmem:[%s0] sm:$0xff]
  %v28 = vld [vmem:[%s0 + $0x8] sm:$0x3]
  %vm29 = vcmask 80896
  %v31 = vsel %vm29, %v25, 0
  %v34 = vsel %vm29, %v26, 0
  %vm36 = vcmask 1041408
  %v38 = vsel %vm36, 0.0, 0
  %40 = vmatprep.subr.mxu0 0.0
  %41 = vmatpush1.msra.mxu0 0.0
  %42 = vmatprep.subr.mxu0 0.0
  %43 = vmatpush1.msra.mxu0 0.0
  %44 = vmatprep.subr.mxu0 0.0
  %45 = vmatpush1.msra.mxu0 0.0
  %46 = vmatprep.subr.mxu0 0.0
  %47 = vmatpush1.msra.mxu0 0.0
  %48 = vmatprep.subr.mxu0 0.0
  %49 = vmatpush1.msra.mxu0 0.0
  %50 = vmatprep.subr.mxu0 0.0
  %51 = vmatpush1.msra.mxu0 0.0
  %52 = vmatprep.subr.mxu0 0.0
  %53 = vmatpush1.msra.mxu0 0.0
  %54 = vmatprep.subr.mxu0 0.0
  %55 = vmatpush1.msra.mxu0 0.0
  %56 = vmatprep.subr.mxu0 0.0
  %57 = vmatpush1.msra.mxu0 0.0
  %58 = vmatprep.subr.mxu0 0.0
  %59 = vmatpush1.msra.mxu0 0.0
  %60 = vmatprep.subr.mxu0 0.0
  %61 = vmatpush1.msra.mxu0 0.0
  %62 = vmatprep.subr.mxu0 0.0
  %63 = vmatpush1.msra.mxu0 0.0
  %64 = vmatprep.subr.mxu0 0.0
  %65 = vmatpush1.msra.mxu0 0.0
  %66 = vmatprep.subr.mxu0 0.0
  %67 = vmatpush1.msra.mxu0 0.0
  %68 = vmatprep.subr.mxu0 0.0
  %69 = vmatpush1.msra.mxu0 %v38
  %70 = vmatprep.subr.mxu0 0.0
  %71 = vmatpush1.msra.mxu0 0.0
  %72 = vmatprep.subr.mxu0 0.0
  %73 = vmatpush2.msra.mxu0 0.0
  %74 = vmatprep.subr.mxu0 0.0
  %75 = vmatpush2.msra.mxu0 0.0
  %76 = vmatprep.subr.mxu0 0.0
  %77 = vmatpush2.msra.mxu0 0.0
  %78 = vmatprep.subr.mxu0 0.0
  %79 = vmatpush2.msra.mxu0 0.0
  %80 = vmatprep.subr.mxu0 0.0
  %81 = vmatpush2.msra.mxu0 0.0
  %82 = vmatprep.subr.mxu0 0.0
  %83 = vmatpush2.msra.mxu0 0.0
  %84 = vmatprep.subr.mxu0 0.0
  %85 = vmatpush2.msra.mxu0 0.0
  %86 = vmatprep.subr.mxu0 0.0
  %87 = vmatpush2.msra.mxu0 0.0
  %88 = vmatprep.subr.mxu0 0.0
  %89 = vmatpush2.msra.mxu0 0.0
  %90 = vmatprep.subr.mxu0 0.0
  %91 = vmatpush2.msra.mxu0 0.0
  %92 = vmatprep.subr.mxu0 0.0
  %93 = vmatpush2.msra.mxu0 0.0
  %94 = vmatprep.subr.mxu0 0.0
  %95 = vmatpush2.msra.mxu0 0.0
  %96 = vmatprep.subr.mxu0 0.0
  %97 = vmatpush2.msra.mxu0 0.0
  %98 = vmatprep.subr.mxu0 0.0
  %99 = vmatpush2.msra.mxu0 0.0
  %100 = vmatprep.subr.mxu0 0.0
  %101 = vmatpush2.msra.mxu0 0.0
  %102 = vmatprep.subr.mxu0 0.0
  %103 = vmatpush2.msra.mxu0 0.0
  %104 = vmatprep.mubr.f32.mxu0 0.0
  %105 = vmatmul.mubr.f32.gmra.mxu0 %v31
  %v106 = vpop.f32.mrf.mxu0
  %v107 = vadd.f32 0.0, %v106
  %v108 = vpop.f32.mrf.mxu0
  %109 = vmatprep.mubr.f32.mxu0 0.0
  %110 = vmatmul.mubr.f32.gmra.mxu0 %v34
  %v111 = vpop.f32.mrf.mxu0
  %v112 = vadd.f32 0.0, %v111
  %v113 = vpop.f32.mrf.mxu0
  %114 = vdwg.mxu0
  %v115 = vadd.f32 %v27, %v107
  %v116 = vadd.f32 %v28, %v112
  %v117 = vtanh.pop %v115
  %v118 = vtanh.pop %v116
  %119 = vst [vmem:[#allocation2] sm:$0xff] %v117
  %120 = vst [vmem:[#allocation2 + $0x8] sm:$0x3] %v118
  %s121 = scalar_lea.vmem %s0, 16
  %v122 = vld [vmem:[%s121] sm:$0xff]
  %v123 = vld [vmem:[%s121 + $0x8] sm:$0x3]
  %v125 = vsel %vm36, %v118, 0
  %127 = vmatprep.subr.mxu0 0.0
  %128 = vmatpush1.msra.mxu0 0.0
  %129 = vmatprep.subr.mxu0 0.0
  %130 = vmatpush1.msra.mxu0 0.0
  %131 = vmatprep.subr.mxu0 0.0
  %132 = vmatpush1.msra.mxu0 0.0
  %133 = vmatprep.subr.mxu0 0.0
  %134 = vmatpush1.msra.mxu0 0.0
  %135 = vmatprep.subr.mxu0 0.0
  %136 = vmatpush1.msra.mxu0 0.0
  %137 = vmatprep.subr.mxu0 0.0
  %138 = vmatpush1.msra.mxu0 0.0
  %139 = vmatprep.subr.mxu0 0.0
  %140 = vmatpush1.msra.mxu0 0.0
  %141 = vmatprep.subr.mxu0 0.0
  %142 = vmatpush1.msra.mxu0 0.0
  %143 = vmatprep.subr.mxu0 0.0
  %144 = vmatpush1.msra.mxu0 0.0
  %145 = vmatprep.subr.mxu0 0.0
  %146 = vmatpush1.msra.mxu0 0.0
  %147 = vmatprep.subr.mxu0 0.0
  %148 = vmatpush1.msra.mxu0 0.0
  %149 = vmatprep.subr.mxu0 0.0
  %150 = vmatpush1.msra.mxu0 0.0
  %151 = vmatprep.subr.mxu0 0.0
  %152 = vmatpush1.msra.mxu0 0.0
  %153 = vmatprep.subr.mxu0 0.0
  %154 = vmatpush1.msra.mxu0 0.0
  %155 = vmatprep.subr.mxu0 0.0
  %156 = vmatpush1.msra.mxu0 %v125
  %157 = vmatprep.subr.mxu0 0.0
  %158 = vmatpush1.msra.mxu0 %v117
  %159 = vmatprep.subr.mxu0 0.0
  %160 = vmatpush2.msra.mxu0 0.0
  %161 = vmatprep.subr.mxu0 0.0
  %162 = vmatpush2.msra.mxu0 0.0
  %163 = vmatprep.subr.mxu0 0.0
  %164 = vmatpush2.msra.mxu0 0.0
  %165 = vmatprep.subr.mxu0 0.0
  %166 = vmatpush2.msra.mxu0 0.0
  %167 = vmatprep.subr.mxu0 0.0
  %168 = vmatpush2.msra.mxu0 0.0
  %169 = vmatprep.subr.mxu0 0.0
  %170 = vmatpush2.msra.mxu0 0.0
  %171 = vmatprep.subr.mxu0 0.0
  %172 = vmatpush2.msra.mxu0 0.0
  %173 = vmatprep.subr.mxu0 0.0
  %174 = vmatpush2.msra.mxu0 0.0
  %175 = vmatprep.subr.mxu0 0.0
  %176 = vmatpush2.msra.mxu0 0.0
  %177 = vmatprep.subr.mxu0 0.0
  %178 = vmatpush2.msra.mxu0 0.0
  %179 = vmatprep.subr.mxu0 0.0
  %180 = vmatpush2.msra.mxu0 0.0
  %181 = vmatprep.subr.mxu0 0.0
  %182 = vmatpush2.msra.mxu0 0.0
  %183 = vmatprep.subr.mxu0 0.0
  %184 = vmatpush2.msra.mxu0 0.0
  %185 = vmatprep.subr.mxu0 0.0
  %186 = vmatpush2.msra.mxu0 0.0
  %187 = vmatprep.subr.mxu0 0.0
  %188 = vmatpush2.msra.mxu0 0.0
  %189 = vmatprep.subr.mxu0 0.0
  %190 = vmatpush2.msra.mxu0 0.0
  %191 = vmatprep.mubr.f32.mxu0 0.0
  %192 = vmatmul.mubr.f32.gmra.mxu0 %v31
  %v193 = vpop.f32.mrf.mxu0
  %v194 = vadd.f32 0.0, %v193
  %v195 = vpop.f32.mrf.mxu0
  %196 = vmatprep.mubr.f32.mxu0 0.0
  %197 = vmatmul.mubr.f32.gmra.mxu0 %v34
  %v198 = vpop.f32.mrf.mxu0
  %v199 = vadd.f32 0.0, %v198
  %v200 = vpop.f32.mrf.mxu0
  %201 = vdwg.mxu0
  %v202 = vadd.f32 %v122, %v194
  %v203 = vadd.f32 %v123, %v199
  %v204 = vtanh.pop %v202
  %v205 = vtanh.pop %v203
  %s206 = scalar_lea.vmem [#allocation2], 16
  %207 = vst [vmem:[%s206] sm:$0xff] %v204
  %208 = vst [vmem:[%s206 + $0x8] sm:$0x3] %v205
  %s209 = scalar_lea.vmem %s0, 32
  %v210 = vld [vmem:[%s209] sm:$0xff]
  %v211 = vld [vmem:[%s209 + $0x8] sm:$0x3]
  %v213 = vsel %vm36, %v205, 0
  %215 = vmatprep.subr.mxu0 0.0
  %216 = vmatpush1.msra.mxu0 0.0
  %217 = vmatprep.subr.mxu0 0.0
  %218 = vmatpush1.msra.mxu0 0.0
  %219 = vmatprep.subr.mxu0 0.0
  %220 = vmatpush1.msra.mxu0 0.0
  %221 = vmatprep.subr.mxu0 0.0
  %222 = vmatpush1.msra.mxu0 0.0
  %223 = vmatprep.subr.mxu0 0.0
  %224 = vmatpush1.msra.mxu0 0.0
  %225 = vmatprep.subr.mxu0 0.0
  %226 = vmatpush1.msra.mxu0 0.0
  %227 = vmatprep.subr.mxu0 0.0
  %228 = vmatpush1.msra.mxu0 0.0
  %229 = vmatprep.subr.mxu0 0.0
  %230 = vmatpush1.msra.mxu0 0.0
  %231 = vmatprep.subr.mxu0 0.0
  %232 = vmatpush1.msra.mxu0 0.0
  %233 = vmatprep.subr.mxu0 0.0
  %234 = vmatpush1.msra.mxu0 0.0
  %235 = vmatprep.subr.mxu0 0.0
  %236 = vmatpush1.msra.mxu0 0.0
  %237 = vmatprep.subr.mxu0 0.0
  %238 = vmatpush1.msra.mxu0 0.0
  %239 = vmatprep.subr.mxu0 0.0
  %240 = vmatpush1.msra.mxu0 0.0
  %241 = vmatprep.subr.mxu0 0.0
  %242 = vmatpush1.msra.mxu0 0.0
  %243 = vmatprep.subr.mxu0 0.0
  %244 = vmatpush1.msra.mxu0 %v213
  %245 = vmatprep.subr.mxu0 0.0
  %246 = vmatpush1.msra.mxu0 %v204
  %247 = vmatprep.subr.mxu0 0.0
  %248 = vmatpush2.msra.mxu0 0.0
  %249 = vmatprep.subr.mxu0 0.0
  %250 = vmatpush2.msra.mxu0 0.0
  %251 = vmatprep.subr.mxu0 0.0
  %252 = vmatpush2.msra.mxu0 0.0
  %253 = vmatprep.subr.mxu0 0.0
  %254 = vmatpush2.msra.mxu0 0.0
  %255 = vmatprep.subr.mxu0 0.0
  %256 = vmatpush2.msra.mxu0 0.0
  %257 = vmatprep.subr.mxu0 0.0
  %258 = vmatpush2.msra.mxu0 0.0
  %259 = vmatprep.subr.mxu0 0.0
  %260 = vmatpush2.msra.mxu0 0.0
  %261 = vmatprep.subr.mxu0 0.0
  %262 = vmatpush2.msra.mxu0 0.0
  %263 = vmatprep.subr.mxu0 0.0
  %264 = vmatpush2.msra.mxu0 0.0
  %265 = vmatprep.subr.mxu0 0.0
  %266 = vmatpush2.msra.mxu0 0.0
  %267 = vmatprep.subr.mxu0 0.0
  %268 = vmatpush2.msra.mxu0 0.0
  %269 = vmatprep.subr.mxu0 0.0
  %270 = vmatpush2.msra.mxu0 0.0
  %271 = vmatprep.subr.mxu0 0.0
  %272 = vmatpush2.msra.mxu0 0.0
  %273 = vmatprep.subr.mxu0 0.0
  %274 = vmatpush2.msra.mxu0 0.0
  %275 = vmatprep.subr.mxu0 0.0
  %276 = vmatpush2.msra.mxu0 0.0
  %277 = vmatprep.subr.mxu0 0.0
  %278 = vmatpush2.msra.mxu0 0.0
  %279 = vmatprep.mubr.f32.mxu0 0.0
  %280 = vmatmul.mubr.f32.gmra.mxu0 %v31
  %v281 = vpop.f32.mrf.mxu0
  %v282 = vadd.f32 0.0, %v281
  %v283 = vpop.f32.mrf.mxu0
  %284 = vmatprep.mubr.f32.mxu0 0.0
  %285 = vmatmul.mubr.f32.gmra.mxu0 %v34
  %v286 = vpop.f32.mrf.mxu0
  %v287 = vadd.f32 0.0, %v286
  %v288 = vpop.f32.mrf.mxu0
  %289 = vdwg.mxu0
  %v290 = vadd.f32 %v210, %v282
  %v291 = vadd.f32 %v211, %v287
  %v292 = vtanh.pop %v290
  %v293 = vtanh.pop %v291
  %s294 = scalar_lea.vmem [#allocation2], 32
  %295 = vst [vmem:[%s294] sm:$0xff] %v292
  %296 = vst [vmem:[%s294 + $0x8] sm:$0x3] %v293
  %s297 = scalar_lea.vmem %s0, 48
  %v298 = vld [vmem:[%s297] sm:$0xff]
  %v299 = vld [vmem:[%s297 + $0x8] sm:$0x3]
  %v301 = vsel %vm36, %v293, 0
  %303 = vmatprep.subr.mxu0 0.0
  %304 = vmatpush1.msra.mxu0 0.0
  %305 = vmatprep.subr.mxu0 0.0
  %306 = vmatpush1.msra.mxu0 0.0
  %307 = vmatprep.subr.mxu0 0.0
  %308 = vmatpush1.msra.mxu0 0.0
  %309 = vmatprep.subr.mxu0 0.0
  %310 = vmatpush1.msra.mxu0 0.0
  %311 = vmatprep.subr.mxu0 0.0
  %312 = vmatpush1.msra.mxu0 0.0
  %313 = vmatprep.subr.mxu0 0.0
  %314 = vmatpush1.msra.mxu0 0.0
  %315 = vmatprep.subr.mxu0 0.0
  %316 = vmatpush1.msra.mxu0 0.0
  %317 = vmatprep.subr.mxu0 0.0
  %318 = vmatpush1.msra.mxu0 0.0
  %319 = vmatprep.subr.mxu0 0.0
  %320 = vmatpush1.msra.mxu0 0.0
  %321 = vmatprep.subr.mxu0 0.0
  %322 = vmatpush1.msra.mxu0 0.0
  %323 = vmatprep.subr.mxu0 0.0
  %324 = vmatpush1.msra.mxu0 0.0
  %325 = vmatprep.subr.mxu0 0.0
  %326 = vmatpush1.msra.mxu0 0.0
  %327 = vmatprep.subr.mxu0 0.0
  %328 = vmatpush1.msra.mxu0 0.0
  %329 = vmatprep.subr.mxu0 0.0
  %330 = vmatpush1.msra.mxu0 0.0
  %331 = vmatprep.subr.mxu0 0.0
  %332 = vmatpush1.msra.mxu0 %v301
  %333 = vmatprep.subr.mxu0 0.0
  %334 = vmatpush1.msra.mxu0 %v292
  %335 = vmatprep.subr.mxu0 0.0
  %336 = vmatpush2.msra.mxu0 0.0
  %337 = vmatprep.subr.mxu0 0.0
  %338 = vmatpush2.msra.mxu0 0.0
  %339 = vmatprep.subr.mxu0 0.0
  %340 = vmatpush2.msra.mxu0 0.0
  %341 = vmatprep.subr.mxu0 0.0
  %342 = vmatpush2.msra.mxu0 0.0
  %343 = vmatprep.subr.mxu0 0.0
  %344 = vmatpush2.msra.mxu0 0.0
  %345 = vmatprep.subr.mxu0 0.0
  %346 = vmatpush2.msra.mxu0 0.0
  %347 = vmatprep.subr.mxu0 0.0
  %348 = vmatpush2.msra.mxu0 0.0
  %349 = vmatprep.subr.mxu0 0.0
  %350 = vmatpush2.msra.mxu0 0.0
  %351 = vmatprep.subr.mxu0 0.0
  %352 = vmatpush2.msra.mxu0 0.0
  %353 = vmatprep.subr.mxu0 0.0
  %354 = vmatpush2.msra.mxu0 0.0
  %355 = vmatprep.subr.mxu0 0.0
  %356 = vmatpush2.msra.mxu0 0.0
  %357 = vmatprep.subr.mxu0 0.0
  %358 = vmatpush2.msra.mxu0 0.0
  %359 = vmatprep.subr.mxu0 0.0
  %360 = vmatpush2.msra.mxu0 0.0
  %361 = vmatprep.subr.mxu0 0.0
  %362 = vmatpush2.msra.mxu0 0.0
  %363 = vmatprep.subr.mxu0 0.0
  %364 = vmatpush2.msra.mxu0 0.0
  %365 = vmatprep.subr.mxu0 0.0
  %366 = vmatpush2.msra.mxu0 0.0
  %367 = vmatprep.mubr.f32.mxu0 0.0
  %368 = vmatmul.mubr.f32.gmra.mxu0 %v31
  %v369 = vpop.f32.mrf.mxu0
  %v370 = vadd.f32 0.0, %v369
  %v371 = vpop.f32.mrf.mxu0
  %372 = vmatprep.mubr.f32.mxu0 0.0
  %373 = vmatmul.mubr.f32.gmra.mxu0 %v34
  %v374 = vpop.f32.mrf.mxu0
  %v375 = vadd.f32 0.0, %v374
  %v376 = vpop.f32.mrf.mxu0
  %377 = vdwg.mxu0
  %v378 = vadd.f32 %v298, %v370
  %v379 = vadd.f32 %v299, %v375
  %v380 = vtanh.pop %v378
  %v381 = vtanh.pop %v379
  %s382 = scalar_lea.vmem [#allocation2], 48
  %383 = vst [vmem:[%s382] sm:$0xff] %v380
  %384 = vst [vmem:[%s382 + $0x8] sm:$0x3] %v381
  %s385 = scalar_lea.vmem %s0, 64
  %v386 = vld [vmem:[%s385] sm:$0xff]
  %v387 = vld [vmem:[%s385 + $0x8] sm:$0x3]
  %v389 = vsel %vm36, %v381, 0
  %391 = vmatprep.subr.mxu0 0.0
  %392 = vmatpush1.msra.mxu0 0.0
  %393 = vmatprep.subr.mxu0 0.0
  %394 = vmatpush1.msra.mxu0 0.0
  %395 = vmatprep.subr.mxu0 0.0
  %396 = vmatpush1.msra.mxu0 0.0
  %397 = vmatprep.subr.mxu0 0.0
  %398 = vmatpush1.msra.mxu0 0.0
  %399 = vmatprep.subr.mxu0 0.0
  %400 = vmatpush1.msra.mxu0 0.0
  %401 = vmatprep.subr.mxu0 0.0
  %402 = vmatpush1.msra.mxu0 0.0
  %403 = vmatprep.subr.mxu0 0.0
  %404 = vmatpush1.msra.mxu0 0.0
  %405 = vmatprep.subr.mxu0 0.0
  %406 = vmatpush1.msra.mxu0 0.0
  %407 = vmatprep.subr.mxu0 0.0
  %408 = vmatpush1.msra.mxu0 0.0
  %409 = vmatprep.subr.mxu0 0.0
  %410 = vmatpush1.msra.mxu0 0.0
  %411 = vmatprep.subr.mxu0 0.0
  %412 = vmatpush1.msra.mxu0 0.0
  %413 = vmatprep.subr.mxu0 0.0
  %414 = vmatpush1.msra.mxu0 0.0
  %415 = vmatprep.subr.mxu0 0.0
  %416 = vmatpush1.msra.mxu0 0.0
  %417 = vmatprep.subr.mxu0 0.0
  %418 = vmatpush1.msra.mxu0 0.0
  %419 = vmatprep.subr.mxu0 0.0
  %420 = vmatpush1.msra.mxu0 %v389
  %421 = vmatprep.subr.mxu0 0.0
  %422 = vmatpush1.msra.mxu0 %v380
  %423 = vmatprep.subr.mxu0 0.0
  %424 = vmatpush2.msra.mxu0 0.0
  %425 = vmatprep.subr.mxu0 0.0
  %426 = vmatpush2.msra.mxu0 0.0
  %427 = vmatprep.subr.mxu0 0.0
  %428 = vmatpush2.msra.mxu0 0.0
  %429 = vmatprep.subr.mxu0 0.0
  %430 = vmatpush2.msra.mxu0 0.0
  %431 = vmatprep.subr.mxu0 0.0
  %432 = vmatpush2.msra.mxu0 0.0
  %433 = vmatprep.subr.mxu0 0.0
  %434 = vmatpush2.msra.mxu0 0.0
  %435 = vmatprep.subr.mxu0 0.0
  %436 = vmatpush2.msra.mxu0 0.0
  %437 = vmatprep.subr.mxu0 0.0
  %438 = vmatpush2.msra.mxu0 0.0
  %439 = vmatprep.subr.mxu0 0.0
  %440 = vmatpush2.msra.mxu0 0.0
  %441 = vmatprep.subr.mxu0 0.0
  %442 = vmatpush2.msra.mxu0 0.0
  %443 = vmatprep.subr.mxu0 0.0
  %444 = vmatpush2.msra.mxu0 0.0
  %445 = vmatprep.subr.mxu0 0.0
  %446 = vmatpush2.msra.mxu0 0.0
  %447 = vmatprep.subr.mxu0 0.0
  %448 = vmatpush2.msra.mxu0 0.0
  %449 = vmatprep.subr.mxu0 0.0
  %450 = vmatpush2.msra.mxu0 0.0
  %451 = vmatprep.subr.mxu0 0.0
  %452 = vmatpush2.msra.mxu0 0.0
  %453 = vmatprep.subr.mxu0 0.0
  %454 = vmatpush2.msra.mxu0 0.0
  %455 = vmatprep.mubr.f32.mxu0 0.0
  %456 = vmatmul.mubr.f32.gmra.mxu0 %v31
  %v457 = vpop.f32.mrf.mxu0
  %v458 = vadd.f32 0.0, %v457
  %v459 = vpop.f32.mrf.mxu0
  %460 = vmatprep.mubr.f32.mxu0 0.0
  %461 = vmatmul.mubr.f32.gmra.mxu0 %v34
  %v462 = vpop.f32.mrf.mxu0
  %v463 = vadd.f32 0.0, %v462
  %v464 = vpop.f32.mrf.mxu0
  %465 = vdwg.mxu0
  %v466 = vadd.f32 %v386, %v458
  %v467 = vadd.f32 %v387, %v463
  %v468 = vtanh.pop %v466
  %v469 = vtanh.pop %v467
  %s470 = scalar_lea.vmem [#allocation2], 64
  %471 = vst [vmem:[%s470] sm:$0xff] %v468
  %472 = vst [vmem:[%s470 + $0x8] sm:$0x3] %v469
  %s473 = scalar_lea.vmem %s0, 80
  %v474 = vld [vmem:[%s473] sm:$0xff]
  %v475 = vld [vmem:[%s473 + $0x8] sm:$0x3]
  %v477 = vsel %vm36, %v469, 0
  %479 = vmatprep.subr.mxu0 0.0
  %480 = vmatpush1.msra.mxu0 0.0
  %481 = vmatprep.subr.mxu0 0.0
  %482 = vmatpush1.msra.mxu0 0.0
  %483 = vmatprep.subr.mxu0 0.0
  %484 = vmatpush1.msra.mxu0 0.0
  %485 = vmatprep.subr.mxu0 0.0
  %486 = vmatpush1.msra.mxu0 0.0
  %487 = vmatprep.subr.mxu0 0.0
  %488 = vmatpush1.msra.mxu0 0.0
  %489 = vmatprep.subr.mxu0 0.0
  %490 = vmatpush1.msra.mxu0 0.0
  %491 = vmatprep.subr.mxu0 0.0
  %492 = vmatpush1.msra.mxu0 0.0
  %493 = vmatprep.subr.mxu0 0.0
  %494 = vmatpush1.msra.mxu0 0.0
  %495 = vmatprep.subr.mxu0 0.0
  %496 = vmatpush1.msra.mxu0 0.0
  %497 = vmatprep.subr.mxu0 0.0
  %498 = vmatpush1.msra.mxu0 0.0
  %499 = vmatprep.subr.mxu0 0.0
  %500 = vmatpush1.msra.mxu0 0.0
  %501 = vmatprep.subr.mxu0 0.0
  %502 = vmatpush1.msra.mxu0 0.0
  %503 = vmatprep.subr.mxu0 0.0
  %504 = vmatpush1.msra.mxu0 0.0
  %505 = vmatprep.subr.mxu0 0.0
  %506 = vmatpush1.msra.mxu0 0.0
  %507 = vmatprep.subr.mxu0 0.0
  %508 = vmatpush1.msra.mxu0 %v477
  %509 = vmatprep.subr.mxu0 0.0
  %510 = vmatpush1.msra.mxu0 %v468
  %511 = vmatprep.subr.mxu0 0.0
  %512 = vmatpush2.msra.mxu0 0.0
  %513 = vmatprep.subr.mxu0 0.0
  %514 = vmatpush2.msra.mxu0 0.0
  %515 = vmatprep.subr.mxu0 0.0
  %516 = vmatpush2.msra.mxu0 0.0
  %517 = vmatprep.subr.mxu0 0.0
  %518 = vmatpush2.msra.mxu0 0.0
  %519 = vmatprep.subr.mxu0 0.0
  %520 = vmatpush2.msra.mxu0 0.0
  %521 = vmatprep.subr.mxu0 0.0
  %522 = vmatpush2.msra.mxu0 0.0
  %523 = vmatprep.subr.mxu0 0.0
  %524 = vmatpush2.msra.mxu0 0.0
  %525 = vmatprep.subr.mxu0 0.0
  %526 = vmatpush2.msra.mxu0 0.0
  %527 = vmatprep.subr.mxu0 0.0
  %528 = vmatpush2.msra.mxu0 0.0
  %529 = vmatprep.subr.mxu0 0.0
  %530 = vmatpush2.msra.mxu0 0.0
  %531 = vmatprep.subr.mxu0 0.0
  %532 = vmatpush2.msra.mxu0 0.0
  %533 = vmatprep.subr.mxu0 0.0
  %534 = vmatpush2.msra.mxu0 0.0
  %535 = vmatprep.subr.mxu0 0.0
  %536 = vmatpush2.msra.mxu0 0.0
  %537 = vmatprep.subr.mxu0 0.0
  %538 = vmatpush2.msra.mxu0 0.0
  %539 = vmatprep.subr.mxu0 0.0
  %540 = vmatpush2.msra.mxu0 0.0
  %541 = vmatprep.subr.mxu0 0.0
  %542 = vmatpush2.msra.mxu0 0.0
  %543 = vmatprep.mubr.f32.mxu0 0.0
  %544 = vmatmul.mubr.f32.gmra.mxu0 %v31
  %v545 = vpop.f32.mrf.mxu0
  %v546 = vadd.f32 0.0, %v545
  %v547 = vpop.f32.mrf.mxu0
  %548 = vmatprep.mubr.f32.mxu0 0.0
  %549 = vmatmul.mubr.f32.gmra.mxu0 %v34
  %v550 = vpop.f32.mrf.mxu0
  %v551 = vadd.f32 0.0, %v550
  %v552 = vpop.f32.mrf.mxu0
  %553 = vdwg.mxu0
  %v554 = vadd.f32 %v474, %v546
  %v555 = vadd.f32 %v475, %v551
  %v556 = vtanh.pop %v554
  %v557 = vtanh.pop %v555
  %s558 = scalar_lea.vmem [#allocation2], 80
  %559 = vst [vmem:[%s558] sm:$0xff] %v556
  %560 = vst [vmem:[%s558 + $0x8] sm:$0x3] %v557
  %s561 = scalar_lea.vmem %s0, 96
  %v562 = vld [vmem:[%s561] sm:$0xff]
  %v563 = vld [vmem:[%s561 + $0x8] sm:$0x3]
  %v565 = vsel %vm36, %v557, 0
  %567 = vmatprep.subr.mxu0 0.0
  %568 = vmatpush1.msra.mxu0 0.0
  %569 = vmatprep.subr.mxu0 0.0
  %570 = vmatpush1.msra.mxu0 0.0
  %571 = vmatprep.subr.mxu0 0.0
  %572 = vmatpush1.msra.mxu0 0.0
  %573 = vmatprep.subr.mxu0 0.0
  %574 = vmatpush1.msra.mxu0 0.0
  %575 = vmatprep.subr.mxu0 0.0
  %576 = vmatpush1.msra.mxu0 0.0
  %577 = vmatprep.subr.mxu0 0.0
  %578 = vmatpush1.msra.mxu0 0.0
  %579 = vmatprep.subr.mxu0 0.0
  %580 = vmatpush1.msra.mxu0 0.0
  %581 = vmatprep.subr.mxu0 0.0
  %582 = vmatpush1.msra.mxu0 0.0
  %583 = vmatprep.subr.mxu0 0.0
  %584 = vmatpush1.msra.mxu0 0.0
  %585 = vmatprep.subr.mxu0 0.0
  %586 = vmatpush1.msra.mxu0 0.0
  %587 = vmatprep.subr.mxu0 0.0
  %588 = vmatpush1.msra.mxu0 0.0
  %589 = vmatprep.subr.mxu0 0.0
  %590 = vmatpush1.msra.mxu0 0.0
  %591 = vmatprep.subr.mxu0 0.0
  %592 = vmatpush1.msra.mxu0 0.0
  %593 = vmatprep.subr.mxu0 0.0
  %594 = vmatpush1.msra.mxu0 0.0
  %595 = vmatprep.subr.mxu0 0.0
  %596 = vmatpush1.msra.mxu0 %v565
  %597 = vmatprep.subr.mxu0 0.0
  %598 = vmatpush1.msra.mxu0 %v556
  %599 = vmatprep.subr.mxu0 0.0
  %600 = vmatpush2.msra.mxu0 0.0
  %601 = vmatprep.subr.mxu0 0.0
  %602 = vmatpush2.msra.mxu0 0.0
  %603 = vmatprep.subr.mxu0 0.0
  %604 = vmatpush2.msra.mxu0 0.0
  %605 = vmatprep.subr.mxu0 0.0
  %606 = vmatpush2.msra.mxu0 0.0
  %607 = vmatprep.subr.mxu0 0.0
  %608 = vmatpush2.msra.mxu0 0.0
  %609 = vmatprep.subr.mxu0 0.0
  %610 = vmatpush2.msra.mxu0 0.0
  %611 = vmatprep.subr.mxu0 0.0
  %612 = vmatpush2.msra.mxu0 0.0
  %613 = vmatprep.subr.mxu0 0.0
  %614 = vmatpush2.msra.mxu0 0.0
  %615 = vmatprep.subr.mxu0 0.0
  %616 = vmatpush2.msra.mxu0 0.0
  %617 = vmatprep.subr.mxu0 0.0
  %618 = vmatpush2.msra.mxu0 0.0
  %619 = vmatprep.subr.mxu0 0.0
  %620 = vmatpush2.msra.mxu0 0.0
  %621 = vmatprep.subr.mxu0 0.0
  %622 = vmatpush2.msra.mxu0 0.0
  %623 = vmatprep.subr.mxu0 0.0
  %624 = vmatpush2.msra.mxu0 0.0
  %625 = vmatprep.subr.mxu0 0.0
  %626 = vmatpush2.msra.mxu0 0.0
  %627 = vmatprep.subr.mxu0 0.0
  %628 = vmatpush2.msra.mxu0 0.0
  %629 = vmatprep.subr.mxu0 0.0
  %630 = vmatpush2.msra.mxu0 0.0
  %631 = vmatprep.mubr.f32.mxu0 0.0
  %632 = vmatmul.mubr.f32.gmra.mxu0 %v31
  %v633 = vpop.f32.mrf.mxu0
  %v634 = vadd.f32 0.0, %v633
  %v635 = vpop.f32.mrf.mxu0
  %636 = vmatprep.mubr.f32.mxu0 0.0
  %637 = vmatmul.mubr.f32.gmra.mxu0 %v34
  %v638 = vpop.f32.mrf.mxu0
  %v639 = vadd.f32 0.0, %v638
  %v640 = vpop.f32.mrf.mxu0
  %641 = vdwg.mxu0
  %v642 = vadd.f32 %v562, %v634
  %v643 = vadd.f32 %v563, %v639
  %v644 = vtanh.pop %v642
  %v645 = vtanh.pop %v643
  %s646 = scalar_lea.vmem [#allocation2], 96
  %647 = vst [vmem:[%s646] sm:$0xff] %v644
  %648 = vst [vmem:[%s646 + $0x8] sm:$0x3] %v645
  %s649 = scalar_lea.vmem %s0, 112
  %v650 = vld [vmem:[%s649] sm:$0xff]
  %v651 = vld [vmem:[%s649 + $0x8] sm:$0x3]
  %v653 = vsel %vm36, %v645, 0
  %655 = vmatprep.subr.mxu0 0.0
  %656 = vmatpush1.msra.mxu0 0.0
  %657 = vmatprep.subr.mxu0 0.0
  %658 = vmatpush1.msra.mxu0 0.0
  %659 = vmatprep.subr.mxu0 0.0
  %660 = vmatpush1.msra.mxu0 0.0
  %661 = vmatprep.subr.mxu0 0.0
  %662 = vmatpush1.msra.mxu0 0.0
  %663 = vmatprep.subr.mxu0 0.0
  %664 = vmatpush1.msra.mxu0 0.0
  %665 = vmatprep.subr.mxu0 0.0
  %666 = vmatpush1.msra.mxu0 0.0
  %667 = vmatprep.subr.mxu0 0.0
  %668 = vmatpush1.msra.mxu0 0.0
  %669 = vmatprep.subr.mxu0 0.0
  %670 = vmatpush1.msra.mxu0 0.0
  %671 = vmatprep.subr.mxu0 0.0
  %672 = vmatpush1.msra.mxu0 0.0
  %673 = vmatprep.subr.mxu0 0.0
  %674 = vmatpush1.msra.mxu0 0.0
  %675 = vmatprep.subr.mxu0 0.0
  %676 = vmatpush1.msra.mxu0 0.0
  %677 = vmatprep.subr.mxu0 0.0
  %678 = vmatpush1.msra.mxu0 0.0
  %679 = vmatprep.subr.mxu0 0.0
  %680 = vmatpush1.msra.mxu0 0.0
  %681 = vmatprep.subr.mxu0 0.0
  %682 = vmatpush1.msra.mxu0 0.0
  %683 = vmatprep.subr.mxu0 0.0
  %684 = vmatpush1.msra.mxu0 %v653
  %685 = vmatprep.subr.mxu0 0.0
  %686 = vmatpush1.msra.mxu0 %v644
  %687 = vmatprep.subr.mxu0 0.0
  %688 = vmatpush2.msra.mxu0 0.0
  %689 = vmatprep.subr.mxu0 0.0
  %690 = vmatpush2.msra.mxu0 0.0
  %691 = vmatprep.subr.mxu0 0.0
  %692 = vmatpush2.msra.mxu0 0.0
  %693 = vmatprep.subr.mxu0 0.0
  %694 = vmatpush2.msra.mxu0 0.0
  %695 = vmatprep.subr.mxu0 0.0
  %696 = vmatpush2.msra.mxu0 0.0
  %697 = vmatprep.subr.mxu0 0.0
  %698 = vmatpush2.msra.mxu0 0.0
  %699 = vmatprep.subr.mxu0 0.0
  %700 = vmatpush2.msra.mxu0 0.0
  %701 = vmatprep.subr.mxu0 0.0
  %702 = vmatpush2.msra.mxu0 0.0
  %703 = vmatprep.subr.mxu0 0.0
  %704 = vmatpush2.msra.mxu0 0.0
  %705 = vmatprep.subr.mxu0 0.0
  %706 = vmatpush2.msra.mxu0 0.0
  %707 = vmatprep.subr.mxu0 0.0
  %708 = vmatpush2.msra.mxu0 0.0
  %709 = vmatprep.subr.mxu0 0.0
  %710 = vmatpush2.msra.mxu0 0.0
  %711 = vmatprep.subr.mxu0 0.0
  %712 = vmatpush2.msra.mxu0 0.0
  %713 = vmatprep.subr.mxu0 0.0
  %714 = vmatpush2.msra.mxu0 0.0
  %715 = vmatprep.subr.mxu0 0.0
  %716 = vmatpush2.msra.mxu0 0.0
  %717 = vmatprep.subr.mxu0 0.0
  %718 = vmatpush2.msra.mxu0 0.0
  %719 = vmatprep.mubr.f32.mxu0 0.0
  %720 = vmatmul.mubr.f32.gmra.mxu0 %v31
  %v721 = vpop.f32.mrf.mxu0
  %v722 = vadd.f32 0.0, %v721
  %v723 = vpop.f32.mrf.mxu0
  %724 = vmatprep.mubr.f32.mxu0 0.0
  %725 = vmatmul.mubr.f32.gmra.mxu0 %v34
  %v726 = vpop.f32.mrf.mxu0
  %v727 = vadd.f32 0.0, %v726
  %v728 = vpop.f32.mrf.mxu0
  %729 = vdwg.mxu0
  %v730 = vadd.f32 %v650, %v722
  %v731 = vadd.f32 %v651, %v727
  %v732 = vtanh.pop %v730
  %v733 = vtanh.pop %v731
  %s734 = scalar_lea.vmem [#allocation2], 112
  %735 = vst [vmem:[%s734] sm:$0xff] %v732
  %736 = vst [vmem:[%s734 + $0x8] sm:$0x3] %v733
  %v737 = vld [vmem:[#allocation2] sm:$0xff]
  %v738 = vld [vmem:[#allocation2 + $0x8] sm:$0x3]
  %v739 = vld [vmem:[#allocation2 + $0x10] sm:$0xff]
  %v740 = vld [vmem:[#allocation2 + $0x18] sm:$0x3]
  %v741 = vld [vmem:[#allocation2 + $0x20] sm:$0xff]
  %v742 = vld [vmem:[#allocation2 + $0x28] sm:$0x3]
  %v743 = vld [vmem:[#allocation2 + $0x30] sm:$0xff]
  %v744 = vld [vmem:[#allocation2 + $0x38] sm:$0x3]
  %v745 = vld [vmem:[#allocation2 + $0x40] sm:$0xff]
  %v746 = vld [vmem:[#allocation2 + $0x48] sm:$0x3]
  %v747 = vld [vmem:[#allocation2 + $0x50] sm:$0xff]
  %v748 = vld [vmem:[#allocation2 + $0x58] sm:$0x3]
  %v749 = vld [vmem:[#allocation2 + $0x60] sm:$0xff]
  %v750 = vld [vmem:[#allocation2 + $0x68] sm:$0x3]
  %v751 = vld [vmem:[#allocation2 + $0x70] sm:$0xff]
  %v752 = vld [vmem:[#allocation2 + $0x78] sm:$0x3]
  %v753 = vld [vmem:[%s2] sm:$0xff]
  %v754 = vld [vmem:[%s2 + $0x8] sm:$0x3]
  %v755 = vld [vmem:[%s3] sm:$0xff]
  %v756 = vld [vmem:[%s3 + $0x8] sm:$0x3]
  %758 = vset.pattern.permute.xlu0 0
  %759 = vperm.xlu0 %758, %v755
  %v760 = vpop.permute.xlu0 %759
  %763 = vset.pattern.permute.xlu0 0
  %764 = vperm.xlu0 %763, %v756
  %v765 = vpop.permute.xlu0 %764
  %v768 = vsel %vm29, %v753, 0
  %v771 = vsel %vm29, %v754, 0
  %v774 = vsel %vm36, %v738, 0
  %776 = vmatprep.subr.mxu0 0.0
  %777 = vmatpush1.msra.mxu0 0.0
  %778 = vmatprep.subr.mxu0 0.0
  %779 = vmatpush1.msra.mxu0 0.0
  %780 = vmatprep.subr.mxu0 0.0
  %781 = vmatpush1.msra.mxu0 0.0
  %782 = vmatprep.subr.mxu0 0.0
  %783 = vmatpush1.msra.mxu0 0.0
  %784 = vmatprep.subr.mxu0 0.0
  %785 = vmatpush1.msra.mxu0 0.0
  %786 = vmatprep.subr.mxu0 0.0
  %787 = vmatpush1.msra.mxu0 0.0
  %788 = vmatprep.subr.mxu0 0.0
  %789 = vmatpush1.msra.mxu0 0.0
  %790 = vmatprep.subr.mxu0 0.0
  %791 = vmatpush1.msra.mxu0 0.0
  %792 = vmatprep.subr.mxu0 0.0
  %793 = vmatpush1.msra.mxu0 0.0
  %794 = vmatprep.subr.mxu0 0.0
  %795 = vmatpush1.msra.mxu0 0.0
  %796 = vmatprep.subr.mxu0 0.0
  %797 = vmatpush1.msra.mxu0 0.0
  %798 = vmatprep.subr.mxu0 0.0
  %799 = vmatpush1.msra.mxu0 0.0
  %800 = vmatprep.subr.mxu0 0.0
  %801 = vmatpush1.msra.mxu0 0.0
  %802 = vmatprep.subr.mxu0 0.0
  %803 = vmatpush1.msra.mxu0 0.0
  %804 = vmatprep.subr.mxu0 0.0
  %805 = vmatpush1.msra.mxu0 %v774
  %806 = vmatprep.subr.mxu0 0.0
  %807 = vmatpush1.msra.mxu0 %v737
  %808 = vmatprep.subr.mxu0 0.0
  %809 = vmatpush2.msra.mxu0 0.0
  %810 = vmatprep.subr.mxu0 0.0
  %811 = vmatpush2.msra.mxu0 0.0
  %812 = vmatprep.subr.mxu0 0.0
  %813 = vmatpush2.msra.mxu0 0.0
  %814 = vmatprep.subr.mxu0 0.0
  %815 = vmatpush2.msra.mxu0 0.0
  %816 = vmatprep.subr.mxu0 0.0
  %817 = vmatpush2.msra.mxu0 0.0
  %818 = vmatprep.subr.mxu0 0.0
  %819 = vmatpush2.msra.mxu0 0.0
  %820 = vmatprep.subr.mxu0 0.0
  %821 = vmatpush2.msra.mxu0 0.0
  %822 = vmatprep.subr.mxu0 0.0
  %823 = vmatpush2.msra.mxu0 0.0
  %824 = vmatprep.subr.mxu0 0.0
  %825 = vmatpush2.msra.mxu0 0.0
  %826 = vmatprep.subr.mxu0 0.0
  %827 = vmatpush2.msra.mxu0 0.0
  %828 = vmatprep.subr.mxu0 0.0
  %829 = vmatpush2.msra.mxu0 0.0
  %830 = vmatprep.subr.mxu0 0.0
  %831 = vmatpush2.msra.mxu0 0.0
  %832 = vmatprep.subr.mxu0 0.0
  %833 = vmatpush2.msra.mxu0 0.0
  %834 = vmatprep.subr.mxu0 0.0
  %835 = vmatpush2.msra.mxu0 0.0
  %836 = vmatprep.subr.mxu0 0.0
  %837 = vmatpush2.msra.mxu0 0.0
  %838 = vmatprep.subr.mxu0 0.0
  %839 = vmatpush2.msra.mxu0 0.0
  %840 = vmatprep.mubr.f32.mxu0 0.0
  %841 = vmatmul.mubr.f32.gmra.mxu0 %v768
  %v842 = vpop.f32.mrf.mxu0
  %v843 = vadd.f32 %v760, %v842
  %v844 = vpop.f32.mrf.mxu0
  %845 = vmatprep.mubr.f32.mxu0 0.0
  %846 = vmatmul.mubr.f32.gmra.mxu0 %v771
  %v847 = vpop.f32.mrf.mxu0
  %v848 = vadd.f32 %v765, %v847
  %v849 = vpop.f32.mrf.mxu0
  %850 = vdwg.mxu0
  %v852 = vsel %vm36, %v740, 0
  %854 = vmatprep.subr.mxu0 0.0
  %855 = vmatpush1.msra.mxu0 0.0
  %856 = vmatprep.subr.mxu0 0.0
  %857 = vmatpush1.msra.mxu0 0.0
  %858 = vmatprep.subr.mxu0 0.0
  %859 = vmatpush1.msra.mxu0 0.0
  %860 = vmatprep.subr.mxu0 0.0
  %861 = vmatpush1.msra.mxu0 0.0
  %862 = vmatprep.subr.mxu0 0.0
  %863 = vmatpush1.msra.mxu0 0.0
  %864 = vmatprep.subr.mxu0 0.0
  %865 = vmatpush1.msra.mxu0 0.0
  %866 = vmatprep.subr.mxu0 0.0
  %867 = vmatpush1.msra.mxu0 0.0
  %868 = vmatprep.subr.mxu0 0.0
  %869 = vmatpush1.msra.mxu0 0.0
  %870 = vmatprep.subr.mxu0 0.0
  %871 = vmatpush1.msra.mxu0 0.0
  %872 = vmatprep.subr.mxu0 0.0
  %873 = vmatpush1.msra.mxu0 0.0
  %874 = vmatprep.subr.mxu0 0.0
  %875 = vmatpush1.msra.mxu0 0.0
  %876 = vmatprep.subr.mxu0 0.0
  %877 = vmatpush1.msra.mxu0 0.0
  %878 = vmatprep.subr.mxu0 0.0
  %879 = vmatpush1.msra.mxu0 0.0
  %880 = vmatprep.subr.mxu0 0.0
  %881 = vmatpush1.msra.mxu0 0.0
  %882 = vmatprep.subr.mxu0 0.0
  %883 = vmatpush1.msra.mxu0 %v852
  %884 = vmatprep.subr.mxu0 0.0
  %885 = vmatpush1.msra.mxu0 %v739
  %886 = vmatprep.subr.mxu0 0.0
  %887 = vmatpush2.msra.mxu0 0.0
  %888 = vmatprep.subr.mxu0 0.0
  %889 = vmatpush2.msra.mxu0 0.0
  %890 = vmatprep.subr.mxu0 0.0
  %891 = vmatpush2.msra.mxu0 0.0
  %892 = vmatprep.subr.mxu0 0.0
  %893 = vmatpush2.msra.mxu0 0.0
  %894 = vmatprep.subr.mxu0 0.0
  %895 = vmatpush2.msra.mxu0 0.0
  %896 = vmatprep.subr.mxu0 0.0
  %897 = vmatpush2.msra.mxu0 0.0
  %898 = vmatprep.subr.mxu0 0.0
  %899 = vmatpush2.msra.mxu0 0.0
  %900 = vmatprep.subr.mxu0 0.0
  %901 = vmatpush2.msra.mxu0 0.0
  %902 = vmatprep.subr.mxu0 0.0
  %903 = vmatpush2.msra.mxu0 0.0
  %904 = vmatprep.subr.mxu0 0.0
  %905 = vmatpush2.msra.mxu0 0.0
  %906 = vmatprep.subr.mxu0 0.0
  %907 = vmatpush2.msra.mxu0 0.0
  %908 = vmatprep.subr.mxu0 0.0
  %909 = vmatpush2.msra.mxu0 0.0
  %910 = vmatprep.subr.mxu0 0.0
  %911 = vmatpush2.msra.mxu0 0.0
  %912 = vmatprep.subr.mxu0 0.0
  %913 = vmatpush2.msra.mxu0 0.0
  %914 = vmatprep.subr.mxu0 0.0
  %915 = vmatpush2.msra.mxu0 0.0
  %916 = vmatprep.subr.mxu0 0.0
  %917 = vmatpush2.msra.mxu0 0.0
  %918 = vmatprep.mubr.f32.mxu0 0.0
  %919 = vmatmul.mubr.f32.gmra.mxu0 %v768
  %v920 = vpop.f32.mrf.mxu0
  %v921 = vadd.f32 %v760, %v920
  %v922 = vpop.f32.mrf.mxu0
  %923 = vmatprep.mubr.f32.mxu0 0.0
  %924 = vmatmul.mubr.f32.gmra.mxu0 %v771
  %v925 = vpop.f32.mrf.mxu0
  %v926 = vadd.f32 %v765, %v925
  %v927 = vpop.f32.mrf.mxu0
  %928 = vdwg.mxu0
  %v930 = vsel %vm36, %v742, 0
  %932 = vmatprep.subr.mxu0 0.0
  %933 = vmatpush1.msra.mxu0 0.0
  %934 = vmatprep.subr.mxu0 0.0
  %935 = vmatpush1.msra.mxu0 0.0
  %936 = vmatprep.subr.mxu0 0.0
  %937 = vmatpush1.msra.mxu0 0.0
  %938 = vmatprep.subr.mxu0 0.0
  %939 = vmatpush1.msra.mxu0 0.0
  %940 = vmatprep.subr.mxu0 0.0
  %941 = vmatpush1.msra.mxu0 0.0
  %942 = vmatprep.subr.mxu0 0.0
  %943 = vmatpush1.msra.mxu0 0.0
  %944 = vmatprep.subr.mxu0 0.0
  %945 = vmatpush1.msra.mxu0 0.0
  %946 = vmatprep.subr.mxu0 0.0
  %947 = vmatpush1.msra.mxu0 0.0
  %948 = vmatprep.subr.mxu0 0.0
  %949 = vmatpush1.msra.mxu0 0.0
  %950 = vmatprep.subr.mxu0 0.0
  %951 = vmatpush1.msra.mxu0 0.0
  %952 = vmatprep.subr.mxu0 0.0
  %953 = vmatpush1.msra.mxu0 0.0
  %954 = vmatprep.subr.mxu0 0.0
  %955 = vmatpush1.msra.mxu0 0.0
  %956 = vmatprep.subr.mxu0 0.0
  %957 = vmatpush1.msra.mxu0 0.0
  %958 = vmatprep.subr.mxu0 0.0
  %959 = vmatpush1.msra.mxu0 0.0
  %960 = vmatprep.subr.mxu0 0.0
  %961 = vmatpush1.msra.mxu0 %v930
  %962 = vmatprep.subr.mxu0 0.0
  %963 = vmatpush1.msra.mxu0 %v741
  %964 = vmatprep.subr.mxu0 0.0
  %965 = vmatpush2.msra.mxu0 0.0
  %966 = vmatprep.subr.mxu0 0.0
  %967 = vmatpush2.msra.mxu0 0.0
  %968 = vmatprep.subr.mxu0 0.0
  %969 = vmatpush2.msra.mxu0 0.0
  %970 = vmatprep.subr.mxu0 0.0
  %971 = vmatpush2.msra.mxu0 0.0
  %972 = vmatprep.subr.mxu0 0.0
  %973 = vmatpush2.msra.mxu0 0.0
  %974 = vmatprep.subr.mxu0 0.0
  %975 = vmatpush2.msra.mxu0 0.0
  %976 = vmatprep.subr.mxu0 0.0
  %977 = vmatpush2.msra.mxu0 0.0
  %978 = vmatprep.subr.mxu0 0.0
  %979 = vmatpush2.msra.mxu0 0.0
  %980 = vmatprep.subr.mxu0 0.0
  %981 = vmatpush2.msra.mxu0 0.0
  %982 = vmatprep.subr.mxu0 0.0
  %983 = vmatpush2.msra.mxu0 0.0
  %984 = vmatprep.subr.mxu0 0.0
  %985 = vmatpush2.msra.mxu0 0.0
  %986 = vmatprep.subr.mxu0 0.0
  %987 = vmatpush2.msra.mxu0 0.0
  %988 = vmatprep.subr.mxu0 0.0
  %989 = vmatpush2.msra.mxu0 0.0
  %990 = vmatprep.subr.mxu0 0.0
  %991 = vmatpush2.msra.mxu0 0.0
  %992 = vmatprep.subr.mxu0 0.0
  %993 = vmatpush2.msra.mxu0 0.0
  %994 = vmatprep.subr.mxu0 0.0
  %995 = vmatpush2.msra.mxu0 0.0
  %996 = vmatprep.mubr.f32.mxu0 0.0
  %997 = vmatmul.mubr.f32.gmra.mxu0 %v768
  %v998 = vpop.f32.mrf.mxu0
  %v999 = vadd.f32 %v760, %v998
  %v1000 = vpop.f32.mrf.mxu0
  %1001 = vmatprep.mubr.f32.mxu0 0.0
  %1002 = vmatmul.mubr.f32.gmra.mxu0 %v771
  %v1003 = vpop.f32.mrf.mxu0
  %v1004 = vadd.f32 %v765, %v1003
  %v1005 = vpop.f32.mrf.mxu0
  %1006 = vdwg.mxu0
  %v1008 = vsel %vm36, %v744, 0
  %1010 = vmatprep.subr.mxu0 0.0
  %1011 = vmatpush1.msra.mxu0 0.0
  %1012 = vmatprep.subr.mxu0 0.0
  %1013 = vmatpush1.msra.mxu0 0.0
  %1014 = vmatprep.subr.mxu0 0.0
  %1015 = vmatpush1.msra.mxu0 0.0
  %1016 = vmatprep.subr.mxu0 0.0
  %1017 = vmatpush1.msra.mxu0 0.0
  %1018 = vmatprep.subr.mxu0 0.0
  %1019 = vmatpush1.msra.mxu0 0.0
  %1020 = vmatprep.subr.mxu0 0.0
  %1021 = vmatpush1.msra.mxu0 0.0
  %1022 = vmatprep.subr.mxu0 0.0
  %1023 = vmatpush1.msra.mxu0 0.0
  %1024 = vmatprep.subr.mxu0 0.0
  %1025 = vmatpush1.msra.mxu0 0.0
  %1026 = vmatprep.subr.mxu0 0.0
  %1027 = vmatpush1.msra.mxu0 0.0
  %1028 = vmatprep.subr.mxu0 0.0
  %1029 = vmatpush1.msra.mxu0 0.0
  %1030 = vmatprep.subr.mxu0 0.0
  %1031 = vmatpush1.msra.mxu0 0.0
  %1032 = vmatprep.subr.mxu0 0.0
  %1033 = vmatpush1.msra.mxu0 0.0
  %1034 = vmatprep.subr.mxu0 0.0
  %1035 = vmatpush1.msra.mxu0 0.0
  %1036 = vmatprep.subr.mxu0 0.0
  %1037 = vmatpush1.msra.mxu0 0.0
  %1038 = vmatprep.subr.mxu0 0.0
  %1039 = vmatpush1.msra.mxu0 %v1008
  %1040 = vmatprep.subr.mxu0 0.0
  %1041 = vmatpush1.msra.mxu0 %v743
  %1042 = vmatprep.subr.mxu0 0.0
  %1043 = vmatpush2.msra.mxu0 0.0
  %1044 = vmatprep.subr.mxu0 0.0
  %1045 = vmatpush2.msra.mxu0 0.0
  %1046 = vmatprep.subr.mxu0 0.0
  %1047 = vmatpush2.msra.mxu0 0.0
  %1048 = vmatprep.subr.mxu0 0.0
  %1049 = vmatpush2.msra.mxu0 0.0
  %1050 = vmatprep.subr.mxu0 0.0
  %1051 = vmatpush2.msra.mxu0 0.0
  %1052 = vmatprep.subr.mxu0 0.0
  %1053 = vmatpush2.msra.mxu0 0.0
  %1054 = vmatprep.subr.mxu0 0.0
  %1055 = vmatpush2.msra.mxu0 0.0
  %1056 = vmatprep.subr.mxu0 0.0
  %1057 = vmatpush2.msra.mxu0 0.0
  %1058 = vmatprep.subr.mxu0 0.0
  %1059 = vmatpush2.msra.mxu0 0.0
  %1060 = vmatprep.subr.mxu0 0.0
  %1061 = vmatpush2.msra.mxu0 0.0
  %1062 = vmatprep.subr.mxu0 0.0
  %1063 = vmatpush2.msra.mxu0 0.0
  %1064 = vmatprep.subr.mxu0 0.0
  %1065 = vmatpush2.msra.mxu0 0.0
  %1066 = vmatprep.subr.mxu0 0.0
  %1067 = vmatpush2.msra.mxu0 0.0
  %1068 = vmatprep.subr.mxu0 0.0
  %1069 = vmatpush2.msra.mxu0 0.0
  %1070 = vmatprep.subr.mxu0 0.0
  %1071 = vmatpush2.msra.mxu0 0.0
  %1072 = vmatprep.subr.mxu0 0.0
  %1073 = vmatpush2.msra.mxu0 0.0
  %1074 = vmatprep.mubr.f32.mxu0 0.0
  %1075 = vmatmul.mubr.f32.gmra.mxu0 %v768
  %v1076 = vpop.f32.mrf.mxu0
  %v1077 = vadd.f32 %v760, %v1076
  %v1078 = vpop.f32.mrf.mxu0
  %1079 = vmatprep.mubr.f32.mxu0 0.0
  %1080 = vmatmul.mubr.f32.gmra.mxu0 %v771
  %v1081 = vpop.f32.mrf.mxu0
  %v1082 = vadd.f32 %v765, %v1081
  %v1083 = vpop.f32.mrf.mxu0
  %1084 = vdwg.mxu0
  %v1086 = vsel %vm36, %v746, 0
  %1088 = vmatprep.subr.mxu0 0.0
  %1089 = vmatpush1.msra.mxu0 0.0
  %1090 = vmatprep.subr.mxu0 0.0
  %1091 = vmatpush1.msra.mxu0 0.0
  %1092 = vmatprep.subr.mxu0 0.0
  %1093 = vmatpush1.msra.mxu0 0.0
  %1094 = vmatprep.subr.mxu0 0.0
  %1095 = vmatpush1.msra.mxu0 0.0
  %1096 = vmatprep.subr.mxu0 0.0
  %1097 = vmatpush1.msra.mxu0 0.0
  %1098 = vmatprep.subr.mxu0 0.0
  %1099 = vmatpush1.msra.mxu0 0.0
  %1100 = vmatprep.subr.mxu0 0.0
  %1101 = vmatpush1.msra.mxu0 0.0
  %1102 = vmatprep.subr.mxu0 0.0
  %1103 = vmatpush1.msra.mxu0 0.0
  %1104 = vmatprep.subr.mxu0 0.0
  %1105 = vmatpush1.msra.mxu0 0.0
  %1106 = vmatprep.subr.mxu0 0.0
  %1107 = vmatpush1.msra.mxu0 0.0
  %1108 = vmatprep.subr.mxu0 0.0
  %1109 = vmatpush1.msra.mxu0 0.0
  %1110 = vmatprep.subr.mxu0 0.0
  %1111 = vmatpush1.msra.mxu0 0.0
  %1112 = vmatprep.subr.mxu0 0.0
  %1113 = vmatpush1.msra.mxu0 0.0
  %1114 = vmatprep.subr.mxu0 0.0
  %1115 = vmatpush1.msra.mxu0 0.0
  %1116 = vmatprep.subr.mxu0 0.0
  %1117 = vmatpush1.msra.mxu0 %v1086
  %1118 = vmatprep.subr.mxu0 0.0
  %1119 = vmatpush1.msra.mxu0 %v745
  %1120 = vmatprep.subr.mxu0 0.0
  %1121 = vmatpush2.msra.mxu0 0.0
  %1122 = vmatprep.subr.mxu0 0.0
  %1123 = vmatpush2.msra.mxu0 0.0
  %1124 = vmatprep.subr.mxu0 0.0
  %1125 = vmatpush2.msra.mxu0 0.0
  %1126 = vmatprep.subr.mxu0 0.0
  %1127 = vmatpush2.msra.mxu0 0.0
  %1128 = vmatprep.subr.mxu0 0.0
  %1129 = vmatpush2.msra.mxu0 0.0
  %1130 = vmatprep.subr.mxu0 0.0
  %1131 = vmatpush2.msra.mxu0 0.0
  %1132 = vmatprep.subr.mxu0 0.0
  %1133 = vmatpush2.msra.mxu0 0.0
  %1134 = vmatprep.subr.mxu0 0.0
  %1135 = vmatpush2.msra.mxu0 0.0
  %1136 = vmatprep.subr.mxu0 0.0
  %1137 = vmatpush2.msra.mxu0 0.0
  %1138 = vmatprep.subr.mxu0 0.0
  %1139 = vmatpush2.msra.mxu0 0.0
  %1140 = vmatprep.subr.mxu0 0.0
  %1141 = vmatpush2.msra.mxu0 0.0
  %1142 = vmatprep.subr.mxu0 0.0
  %1143 = vmatpush2.msra.mxu0 0.0
  %1144 = vmatprep.subr.mxu0 0.0
  %1145 = vmatpush2.msra.mxu0 0.0
  %1146 = vmatprep.subr.mxu0 0.0
  %1147 = vmatpush2.msra.mxu0 0.0
  %1148 = vmatprep.subr.mxu0 0.0
  %1149 = vmatpush2.msra.mxu0 0.0
  %1150 = vmatprep.subr.mxu0 0.0
  %1151 = vmatpush2.msra.mxu0 0.0
  %1152 = vmatprep.mubr.f32.mxu0 0.0
  %1153 = vmatmul.mubr.f32.gmra.mxu0 %v768
  %v1154 = vpop.f32.mrf.mxu0
  %v1155 = vadd.f32 %v760, %v1154
  %v1156 = vpop.f32.mrf.mxu0
  %1157 = vmatprep.mubr.f32.mxu0 0.0
  %1158 = vmatmul.mubr.f32.gmra.mxu0 %v771
  %v1159 = vpop.f32.mrf.mxu0
  %v1160 = vadd.f32 %v765, %v1159
  %v1161 = vpop.f32.mrf.mxu0
  %1162 = vdwg.mxu0
  %v1164 = vsel %vm36, %v748, 0
  %1166 = vmatprep.subr.mxu0 0.0
  %1167 = vmatpush1.msra.mxu0 0.0
  %1168 = vmatprep.subr.mxu0 0.0
  %1169 = vmatpush1.msra.mxu0 0.0
  %1170 = vmatprep.subr.mxu0 0.0
  %1171 = vmatpush1.msra.mxu0 0.0
  %1172 = vmatprep.subr.mxu0 0.0
  %1173 = vmatpush1.msra.mxu0 0.0
  %1174 = vmatprep.subr.mxu0 0.0
  %1175 = vmatpush1.msra.mxu0 0.0
  %1176 = vmatprep.subr.mxu0 0.0
  %1177 = vmatpush1.msra.mxu0 0.0
  %1178 = vmatprep.subr.mxu0 0.0
  %1179 = vmatpush1.msra.mxu0 0.0
  %1180 = vmatprep.subr.mxu0 0.0
  %1181 = vmatpush1.msra.mxu0 0.0
  %1182 = vmatprep.subr.mxu0 0.0
  %1183 = vmatpush1.msra.mxu0 0.0
  %1184 = vmatprep.subr.mxu0 0.0
  %1185 = vmatpush1.msra.mxu0 0.0
  %1186 = vmatprep.subr.mxu0 0.0
  %1187 = vmatpush1.msra.mxu0 0.0
  %1188 = vmatprep.subr.mxu0 0.0
  %1189 = vmatpush1.msra.mxu0 0.0
  %1190 = vmatprep.subr.mxu0 0.0
  %1191 = vmatpush1.msra.mxu0 0.0
  %1192 = vmatprep.subr.mxu0 0.0
  %1193 = vmatpush1.msra.mxu0 0.0
  %1194 = vmatprep.subr.mxu0 0.0
  %1195 = vmatpush1.msra.mxu0 %v1164
  %1196 = vmatprep.subr.mxu0 0.0
  %1197 = vmatpush1.msra.mxu0 %v747
  %1198 = vmatprep.subr.mxu0 0.0
  %1199 = vmatpush2.msra.mxu0 0.0
  %1200 = vmatprep.subr.mxu0 0.0
  %1201 = vmatpush2.msra.mxu0 0.0
  %1202 = vmatprep.subr.mxu0 0.0
  %1203 = vmatpush2.msra.mxu0 0.0
  %1204 = vmatprep.subr.mxu0 0.0
  %1205 = vmatpush2.msra.mxu0 0.0
  %1206 = vmatprep.subr.mxu0 0.0
  %1207 = vmatpush2.msra.mxu0 0.0
  %1208 = vmatprep.subr.mxu0 0.0
  %1209 = vmatpush2.msra.mxu0 0.0
  %1210 = vmatprep.subr.mxu0 0.0
  %1211 = vmatpush2.msra.mxu0 0.0
  %1212 = vmatprep.subr.mxu0 0.0
  %1213 = vmatpush2.msra.mxu0 0.0
  %1214 = vmatprep.subr.mxu0 0.0
  %1215 = vmatpush2.msra.mxu0 0.0
  %1216 = vmatprep.subr.mxu0 0.0
  %1217 = vmatpush2.msra.mxu0 0.0
  %1218 = vmatprep.subr.mxu0 0.0
  %1219 = vmatpush2.msra.mxu0 0.0
  %1220 = vmatprep.subr.mxu0 0.0
  %1221 = vmatpush2.msra.mxu0 0.0
  %1222 = vmatprep.subr.mxu0 0.0
  %1223 = vmatpush2.msra.mxu0 0.0
  %1224 = vmatprep.subr.mxu0 0.0
  %1225 = vmatpush2.msra.mxu0 0.0
  %1226 = vmatprep.subr.mxu0 0.0
  %1227 = vmatpush2.msra.mxu0 0.0
  %1228 = vmatprep.subr.mxu0 0.0
  %1229 = vmatpush2.msra.mxu0 0.0
  %1230 = vmatprep.mubr.f32.mxu0 0.0
  %1231 = vmatmul.mubr.f32.gmra.mxu0 %v768
  %v1232 = vpop.f32.mrf.mxu0
  %v1233 = vadd.f32 %v760, %v1232
  %v1234 = vpop.f32.mrf.mxu0
  %1235 = vmatprep.mubr.f32.mxu0 0.0
  %1236 = vmatmul.mubr.f32.gmra.mxu0 %v771
  %v1237 = vpop.f32.mrf.mxu0
  %v1238 = vadd.f32 %v765, %v1237
  %v1239 = vpop.f32.mrf.mxu0
  %1240 = vdwg.mxu0
  %v1242 = vsel %vm36, %v750, 0
  %1244 = vmatprep.subr.mxu0 0.0
  %1245 = vmatpush1.msra.mxu0 0.0
  %1246 = vmatprep.subr.mxu0 0.0
  %1247 = vmatpush1.msra.mxu0 0.0
  %1248 = vmatprep.subr.mxu0 0.0
  %1249 = vmatpush1.msra.mxu0 0.0
  %1250 = vmatprep.subr.mxu0 0.0
  %1251 = vmatpush1.msra.mxu0 0.0
  %1252 = vmatprep.subr.mxu0 0.0
  %1253 = vmatpush1.msra.mxu0 0.0
  %1254 = vmatprep.subr.mxu0 0.0
  %1255 = vmatpush1.msra.mxu0 0.0
  %1256 = vmatprep.subr.mxu0 0.0
  %1257 = vmatpush1.msra.mxu0 0.0
  %1258 = vmatprep.subr.mxu0 0.0
  %1259 = vmatpush1.msra.mxu0 0.0
  %1260 = vmatprep.subr.mxu0 0.0
  %1261 = vmatpush1.msra.mxu0 0.0
  %1262 = vmatprep.subr.mxu0 0.0
  %1263 = vmatpush1.msra.mxu0 0.0
  %1264 = vmatprep.subr.mxu0 0.0
  %1265 = vmatpush1.msra.mxu0 0.0
  %1266 = vmatprep.subr.mxu0 0.0
  %1267 = vmatpush1.msra.mxu0 0.0
  %1268 = vmatprep.subr.mxu0 0.0
  %1269 = vmatpush1.msra.mxu0 0.0
  %1270 = vmatprep.subr.mxu0 0.0
  %1271 = vmatpush1.msra.mxu0 0.0
  %1272 = vmatprep.subr.mxu0 0.0
  %1273 = vmatpush1.msra.mxu0 %v1242
  %1274 = vmatprep.subr.mxu0 0.0
  %1275 = vmatpush1.msra.mxu0 %v749
  %1276 = vmatprep.subr.mxu0 0.0
  %1277 = vmatpush2.msra.mxu0 0.0
  %1278 = vmatprep.subr.mxu0 0.0
  %1279 = vmatpush2.msra.mxu0 0.0
  %1280 = vmatprep.subr.mxu0 0.0
  %1281 = vmatpush2.msra.mxu0 0.0
  %1282 = vmatprep.subr.mxu0 0.0
  %1283 = vmatpush2.msra.mxu0 0.0
  %1284 = vmatprep.subr.mxu0 0.0
  %1285 = vmatpush2.msra.mxu0 0.0
  %1286 = vmatprep.subr.mxu0 0.0
  %1287 = vmatpush2.msra.mxu0 0.0
  %1288 = vmatprep.subr.mxu0 0.0
  %1289 = vmatpush2.msra.mxu0 0.0
  %1290 = vmatprep.subr.mxu0 0.0
  %1291 = vmatpush2.msra.mxu0 0.0
  %1292 = vmatprep.subr.mxu0 0.0
  %1293 = vmatpush2.msra.mxu0 0.0
  %1294 = vmatprep.subr.mxu0 0.0
  %1295 = vmatpush2.msra.mxu0 0.0
  %1296 = vmatprep.subr.mxu0 0.0
  %1297 = vmatpush2.msra.mxu0 0.0
  %1298 = vmatprep.subr.mxu0 0.0
  %1299 = vmatpush2.msra.mxu0 0.0
  %1300 = vmatprep.subr.mxu0 0.0
  %1301 = vmatpush2.msra.mxu0 0.0
  %1302 = vmatprep.subr.mxu0 0.0
  %1303 = vmatpush2.msra.mxu0 0.0
  %1304 = vmatprep.subr.mxu0 0.0
  %1305 = vmatpush2.msra.mxu0 0.0
  %1306 = vmatprep.subr.mxu0 0.0
  %1307 = vmatpush2.msra.mxu0 0.0
  %1308 = vmatprep.mubr.f32.mxu0 0.0
  %1309 = vmatmul.mubr.f32.gmra.mxu0 %v768
  %v1310 = vpop.f32.mrf.mxu0
  %v1311 = vadd.f32 %v760, %v1310
  %v1312 = vpop.f32.mrf.mxu0
  %1313 = vmatprep.mubr.f32.mxu0 0.0
  %1314 = vmatmul.mubr.f32.gmra.mxu0 %v771
  %v1315 = vpop.f32.mrf.mxu0
  %v1316 = vadd.f32 %v765, %v1315
  %v1317 = vpop.f32.mrf.mxu0
  %1318 = vdwg.mxu0
  %v1320 = vsel %vm36, %v752, 0
  %1322 = vmatprep.subr.mxu0 0.0
  %1323 = vmatpush1.msra.mxu0 0.0
  %1324 = vmatprep.subr.mxu0 0.0
  %1325 = vmatpush1.msra.mxu0 0.0
  %1326 = vmatprep.subr.mxu0 0.0
  %1327 = vmatpush1.msra.mxu0 0.0
  %1328 = vmatprep.subr.mxu0 0.0
  %1329 = vmatpush1.msra.mxu0 0.0
  %1330 = vmatprep.subr.mxu0 0.0
  %1331 = vmatpush1.msra.mxu0 0.0
  %1332 = vmatprep.subr.mxu0 0.0
  %1333 = vmatpush1.msra.mxu0 0.0
  %1334 = vmatprep.subr.mxu0 0.0
  %1335 = vmatpush1.msra.mxu0 0.0
  %1336 = vmatprep.subr.mxu0 0.0
  %1337 = vmatpush1.msra.mxu0 0.0
  %1338 = vmatprep.subr.mxu0 0.0
  %1339 = vmatpush1.msra.mxu0 0.0
  %1340 = vmatprep.subr.mxu0 0.0
  %1341 = vmatpush1.msra.mxu0 0.0
  %1342 = vmatprep.subr.mxu0 0.0
  %1343 = vmatpush1.msra.mxu0 0.0
  %1344 = vmatprep.subr.mxu0 0.0
  %1345 = vmatpush1.msra.mxu0 0.0
  %1346 = vmatprep.subr.mxu0 0.0
  %1347 = vmatpush1.msra.mxu0 0.0
  %1348 = vmatprep.subr.mxu0 0.0
  %1349 = vmatpush1.msra.mxu0 0.0
  %1350 = vmatprep.subr.mxu0 0.0
  %1351 = vmatpush1.msra.mxu0 %v1320
  %1352 = vmatprep.subr.mxu0 0.0
  %1353 = vmatpush1.msra.mxu0 %v751
  %1354 = vmatprep.subr.mxu0 0.0
  %1355 = vmatpush2.msra.mxu0 0.0
  %1356 = vmatprep.subr.mxu0 0.0
  %1357 = vmatpush2.msra.mxu0 0.0
  %1358 = vmatprep.subr.mxu0 0.0
  %1359 = vmatpush2.msra.mxu0 0.0
  %1360 = vmatprep.subr.mxu0 0.0
  %1361 = vmatpush2.msra.mxu0 0.0
  %1362 = vmatprep.subr.mxu0 0.0
  %1363 = vmatpush2.msra.mxu0 0.0
  %1364 = vmatprep.subr.mxu0 0.0
  %1365 = vmatpush2.msra.mxu0 0.0
  %1366 = vmatprep.subr.mxu0 0.0
  %1367 = vmatpush2.msra.mxu0 0.0
  %1368 = vmatprep.subr.mxu0 0.0
  %1369 = vmatpush2.msra.mxu0 0.0
  %1370 = vmatprep.subr.mxu0 0.0
  %1371 = vmatpush2.msra.mxu0 0.0
  %1372 = vmatprep.subr.mxu0 0.0
  %1373 = vmatpush2.msra.mxu0 0.0
  %1374 = vmatprep.subr.mxu0 0.0
  %1375 = vmatpush2.msra.mxu0 0.0
  %1376 = vmatprep.subr.mxu0 0.0
  %1377 = vmatpush2.msra.mxu0 0.0
  %1378 = vmatprep.subr.mxu0 0.0
  %1379 = vmatpush2.msra.mxu0 0.0
  %1380 = vmatprep.subr.mxu0 0.0
  %1381 = vmatpush2.msra.mxu0 0.0
  %1382 = vmatprep.subr.mxu0 0.0
  %1383 = vmatpush2.msra.mxu0 0.0
  %1384 = vmatprep.subr.mxu0 0.0
  %1385 = vmatpush2.msra.mxu0 0.0
  %1386 = vmatprep.mubr.f32.mxu0 0.0
  %1387 = vmatmul.mubr.f32.gmra.mxu0 %v768
  %v1388 = vpop.f32.mrf.mxu0
  %v1389 = vadd.f32 %v760, %v1388
  %v1390 = vpop.f32.mrf.mxu0
  %1391 = vmatprep.mubr.f32.mxu0 0.0
  %1392 = vmatmul.mubr.f32.gmra.mxu0 %v771
  %v1393 = vpop.f32.mrf.mxu0
  %v1394 = vadd.f32 %v765, %v1393
  %v1395 = vpop.f32.mrf.mxu0
  %1396 = vdwg.mxu0
  %v1397 = vmax.f32 %v843, 0.0
  %v1398 = vmax.f32 %v848, 0.0
  %v1399 = vmax.f32 %v921, 0.0
  %v1400 = vmax.f32 %v926, 0.0
  %v1401 = vmax.f32 %v999, 0.0
  %v1402 = vmax.f32 %v1004, 0.0
  %v1403 = vmax.f32 %v1077, 0.0
  %v1404 = vmax.f32 %v1082, 0.0
  %v1405 = vmax.f32 %v1155, 0.0
  %v1406 = vmax.f32 %v1160, 0.0
  %v1407 = vmax.f32 %v1233, 0.0
  %v1408 = vmax.f32 %v1238, 0.0
  %v1409 = vmax.f32 %v1311, 0.0
  %v1410 = vmax.f32 %v1316, 0.0
  %v1411 = vmax.f32 %v1389, 0.0
  %v1412 = vmax.f32 %v1394, 0.0
  %v1413 = vld [vmem:[%s4] sm:$0x1]
  %v1414 = vld [vmem:[#allocation3] sm:$0x1]
  %1416 = vset.pattern.permute.xlu0 0
  %1417 = vperm.xlu0 %1416, %v1414
  %v1418 = vpop.permute.xlu0 %1417
  %v1420 = vlaneseq
  %v1421 = vshrl.u32 %v1420, 7
  %v1422 = vsub.s32 0, %v1421
  %v1423 = vrot.slane %v1418, %v1422
  %v1425 = vsel %vm29, %v1413, 0
  %v1428 = vsel %vm36, %v1398, 0
  %1430 = vmatprep.subr.mxu0 0.0
  %1431 = vmatpush1.msra.mxu0 0.0
  %1432 = vmatprep.subr.mxu0 0.0
  %1433 = vmatpush1.msra.mxu0 0.0
  %1434 = vmatprep.subr.mxu0 0.0
  %1435 = vmatpush1.msra.mxu0 0.0
  %1436 = vmatprep.subr.mxu0 0.0
  %1437 = vmatpush1.msra.mxu0 0.0
  %1438 = vmatprep.subr.mxu0 0.0
  %1439 = vmatpush1.msra.mxu0 0.0
  %1440 = vmatprep.subr.mxu0 0.0
  %1441 = vmatpush1.msra.mxu0 0.0
  %1442 = vmatprep.subr.mxu0 0.0
  %1443 = vmatpush1.msra.mxu0 0.0
  %1444 = vmatprep.subr.mxu0 0.0
  %1445 = vmatpush1.msra.mxu0 0.0
  %1446 = vmatprep.subr.mxu0 0.0
  %1447 = vmatpush1.msra.mxu0 0.0
  %1448 = vmatprep.subr.mxu0 0.0
  %1449 = vmatpush1.msra.mxu0 0.0
  %1450 = vmatprep.subr.mxu0 0.0
  %1451 = vmatpush1.msra.mxu0 0.0
  %1452 = vmatprep.subr.mxu0 0.0
  %1453 = vmatpush1.msra.mxu0 0.0
  %1454 = vmatprep.subr.mxu0 0.0
  %1455 = vmatpush1.msra.mxu0 0.0
  %1456 = vmatprep.subr.mxu0 0.0
  %1457 = vmatpush1.msra.mxu0 0.0
  %1458 = vmatprep.subr.mxu0 0.0
  %1459 = vmatpush1.msra.mxu0 %v1428
  %1460 = vmatprep.subr.mxu0 0.0
  %1461 = vmatpush1.msra.mxu0 %v1397
  %1462 = vmatprep.subr.mxu0 0.0
  %1463 = vmatpush2.msra.mxu0 0.0
  %1464 = vmatprep.subr.mxu0 0.0
  %1465 = vmatpush2.msra.mxu0 0.0
  %1466 = vmatprep.subr.mxu0 0.0
  %1467 = vmatpush2.msra.mxu0 0.0
  %1468 = vmatprep.subr.mxu0 0.0
  %1469 = vmatpush2.msra.mxu0 0.0
  %1470 = vmatprep.subr.mxu0 0.0
  %1471 = vmatpush2.msra.mxu0 0.0
  %1472 = vmatprep.subr.mxu0 0.0
  %1473 = vmatpush2.msra.mxu0 0.0
  %1474 = vmatprep.subr.mxu0 0.0
  %1475 = vmatpush2.msra.mxu0 0.0
  %1476 = vmatprep.subr.mxu0 0.0
  %1477 = vmatpush2.msra.mxu0 0.0
  %1478 = vmatprep.subr.mxu0 0.0
  %1479 = vmatpush2.msra.mxu0 0.0
  %1480 = vmatprep.subr.mxu0 0.0
  %1481 = vmatpush2.msra.mxu0 0.0
  %1482 = vmatprep.subr.mxu0 0.0
  %1483 = vmatpush2.msra.mxu0 0.0
  %1484 = vmatprep.subr.mxu0 0.0
  %1485 = vmatpush2.msra.mxu0 0.0
  %1486 = vmatprep.subr.mxu0 0.0
  %1487 = vmatpush2.msra.mxu0 0.0
  %1488 = vmatprep.subr.mxu0 0.0
  %1489 = vmatpush2.msra.mxu0 0.0
  %1490 = vmatprep.subr.mxu0 0.0
  %1491 = vmatpush2.msra.mxu0 0.0
  %1492 = vmatprep.subr.mxu0 0.0
  %1493 = vmatpush2.msra.mxu0 0.0
  %1494 = vmatprep.mubr.f32.mxu0 0.0
  %1495 = vmatmul.mubr.f32.gmra.mxu0 %v1425
  %v1496 = vpop.f32.mrf.mxu0
  %v1497 = vadd.f32 %v1423, %v1496
  %v1498 = vpop.f32.mrf.mxu0
  %1499 = vdwg.mxu0
  %v1501 = vsel %vm36, %v1400, 0
  %1503 = vmatprep.subr.mxu0 0.0
  %1504 = vmatpush1.msra.mxu0 0.0
  %1505 = vmatprep.subr.mxu0 0.0
  %1506 = vmatpush1.msra.mxu0 0.0
  %1507 = vmatprep.subr.mxu0 0.0
  %1508 = vmatpush1.msra.mxu0 0.0
  %1509 = vmatprep.subr.mxu0 0.0
  %1510 = vmatpush1.msra.mxu0 0.0
  %1511 = vmatprep.subr.mxu0 0.0
  %1512 = vmatpush1.msra.mxu0 0.0
  %1513 = vmatprep.subr.mxu0 0.0
  %1514 = vmatpush1.msra.mxu0 0.0
  %1515 = vmatprep.subr.mxu0 0.0
  %1516 = vmatpush1.msra.mxu0 0.0
  %1517 = vmatprep.subr.mxu0 0.0
  %1518 = vmatpush1.msra.mxu0 0.0
  %1519 = vmatprep.subr.mxu0 0.0
  %1520 = vmatpush1.msra.mxu0 0.0
  %1521 = vmatprep.subr.mxu0 0.0
  %1522 = vmatpush1.msra.mxu0 0.0
  %1523 = vmatprep.subr.mxu0 0.0
  %1524 = vmatpush1.msra.mxu0 0.0
  %1525 = vmatprep.subr.mxu0 0.0
  %1526 = vmatpush1.msra.mxu0 0.0
  %1527 = vmatprep.subr.mxu0 0.0
  %1528 = vmatpush1.msra.mxu0 0.0
  %1529 = vmatprep.subr.mxu0 0.0
  %1530 = vmatpush1.msra.mxu0 0.0
  %1531 = vmatprep.subr.mxu0 0.0
  %1532 = vmatpush1.msra.mxu0 %v1501
  %1533 = vmatprep.subr.mxu0 0.0
  %1534 = vmatpush1.msra.mxu0 %v1399
  %1535 = vmatprep.subr.mxu0 0.0
  %1536 = vmatpush2.msra.mxu0 0.0
  %1537 = vmatprep.subr.mxu0 0.0
  %1538 = vmatpush2.msra.mxu0 0.0
  %1539 = vmatprep.subr.mxu0 0.0
  %1540 = vmatpush2.msra.mxu0 0.0
  %1541 = vmatprep.subr.mxu0 0.0
  %1542 = vmatpush2.msra.mxu0 0.0
  %1543 = vmatprep.subr.mxu0 0.0
  %1544 = vmatpush2.msra.mxu0 0.0
  %1545 = vmatprep.subr.mxu0 0.0
  %1546 = vmatpush2.msra.mxu0 0.0
  %1547 = vmatprep.subr.mxu0 0.0
  %1548 = vmatpush2.msra.mxu0 0.0
  %1549 = vmatprep.subr.mxu0 0.0
  %1550 = vmatpush2.msra.mxu0 0.0
  %1551 = vmatprep.subr.mxu0 0.0
  %1552 = vmatpush2.msra.mxu0 0.0
  %1553 = vmatprep.subr.mxu0 0.0
  %1554 = vmatpush2.msra.mxu0 0.0
  %1555 = vmatprep.subr.mxu0 0.0
  %1556 = vmatpush2.msra.mxu0 0.0
  %1557 = vmatprep.subr.mxu0 0.0
  %1558 = vmatpush2.msra.mxu0 0.0
  %1559 = vmatprep.subr.mxu0 0.0
  %1560 = vmatpush2.msra.mxu0 0.0
  %1561 = vmatprep.subr.mxu0 0.0
  %1562 = vmatpush2.msra.mxu0 0.0
  %1563 = vmatprep.subr.mxu0 0.0
  %1564 = vmatpush2.msra.mxu0 0.0
  %1565 = vmatprep.subr.mxu0 0.0
  %1566 = vmatpush2.msra.mxu0 0.0
  %1567 = vmatprep.mubr.f32.mxu0 0.0
  %1568 = vmatmul.mubr.f32.gmra.mxu0 %v1425
  %v1569 = vpop.f32.mrf.mxu0
  %v1570 = vadd.f32 %v1423, %v1569
  %v1571 = vpop.f32.mrf.mxu0
  %1572 = vdwg.mxu0
  %v1574 = vsel %vm36, %v1402, 0
  %1576 = vmatprep.subr.mxu0 0.0
  %1577 = vmatpush1.msra.mxu0 0.0
  %1578 = vmatprep.subr.mxu0 0.0
  %1579 = vmatpush1.msra.mxu0 0.0
  %1580 = vmatprep.subr.mxu0 0.0
  %1581 = vmatpush1.msra.mxu0 0.0
  %1582 = vmatprep.subr.mxu0 0.0
  %1583 = vmatpush1.msra.mxu0 0.0
  %1584 = vmatprep.subr.mxu0 0.0
  %1585 = vmatpush1.msra.mxu0 0.0
  %1586 = vmatprep.subr.mxu0 0.0
  %1587 = vmatpush1.msra.mxu0 0.0
  %1588 = vmatprep.subr.mxu0 0.0
  %1589 = vmatpush1.msra.mxu0 0.0
  %1590 = vmatprep.subr.mxu0 0.0
  %1591 = vmatpush1.msra.mxu0 0.0
  %1592 = vmatprep.subr.mxu0 0.0
  %1593 = vmatpush1.msra.mxu0 0.0
  %1594 = vmatprep.subr.mxu0 0.0
  %1595 = vmatpush1.msra.mxu0 0.0
  %1596 = vmatprep.subr.mxu0 0.0
  %1597 = vmatpush1.msra.mxu0 0.0
  %1598 = vmatprep.subr.mxu0 0.0
  %1599 = vmatpush1.msra.mxu0 0.0
  %1600 = vmatprep.subr.mxu0 0.0
  %1601 = vmatpush1.msra.mxu0 0.0
  %1602 = vmatprep.subr.mxu0 0.0
  %1603 = vmatpush1.msra.mxu0 0.0
  %1604 = vmatprep.subr.mxu0 0.0
  %1605 = vmatpush1.msra.mxu0 %v1574
  %1606 = vmatprep.subr.mxu0 0.0
  %1607 = vmatpush1.msra.mxu0 %v1401
  %1608 = vmatprep.subr.mxu0 0.0
  %1609 = vmatpush2.msra.mxu0 0.0
  %1610 = vmatprep.subr.mxu0 0.0
  %1611 = vmatpush2.msra.mxu0 0.0
  %1612 = vmatprep.subr.mxu0 0.0
  %1613 = vmatpush2.msra.mxu0 0.0
  %1614 = vmatprep.subr.mxu0 0.0
  %1615 = vmatpush2.msra.mxu0 0.0
  %1616 = vmatprep.subr.mxu0 0.0
  %1617 = vmatpush2.msra.mxu0 0.0
  %1618 = vmatprep.subr.mxu0 0.0
  %1619 = vmatpush2.msra.mxu0 0.0
  %1620 = vmatprep.subr.mxu0 0.0
  %1621 = vmatpush2.msra.mxu0 0.0
  %1622 = vmatprep.subr.mxu0 0.0
  %1623 = vmatpush2.msra.mxu0 0.0
  %1624 = vmatprep.subr.mxu0 0.0
  %1625 = vmatpush2.msra.mxu0 0.0
  %1626 = vmatprep.subr.mxu0 0.0
  %1627 = vmatpush2.msra.mxu0 0.0
  %1628 = vmatprep.subr.mxu0 0.0
  %1629 = vmatpush2.msra.mxu0 0.0
  %1630 = vmatprep.subr.mxu0 0.0
  %1631 = vmatpush2.msra.mxu0 0.0
  %1632 = vmatprep.subr.mxu0 0.0
  %1633 = vmatpush2.msra.mxu0 0.0
  %1634 = vmatprep.subr.mxu0 0.0
  %1635 = vmatpush2.msra.mxu0 0.0
  %1636 = vmatprep.subr.mxu0 0.0
  %1637 = vmatpush2.msra.mxu0 0.0
  %1638 = vmatprep.subr.mxu0 0.0
  %1639 = vmatpush2.msra.mxu0 0.0
  %1640 = vmatprep.mubr.f32.mxu0 0.0
  %1641 = vmatmul.mubr.f32.gmra.mxu0 %v1425
  %v1642 = vpop.f32.mrf.mxu0
  %v1643 = vadd.f32 %v1423, %v1642
  %v1644 = vpop.f32.mrf.mxu0
  %1645 = vdwg.mxu0
  %v1647 = vsel %vm36, %v1404, 0
  %1649 = vmatprep.subr.mxu0 0.0
  %1650 = vmatpush1.msra.mxu0 0.0
  %1651 = vmatprep.subr.mxu0 0.0
  %1652 = vmatpush1.msra.mxu0 0.0
  %1653 = vmatprep.subr.mxu0 0.0
  %1654 = vmatpush1.msra.mxu0 0.0
  %1655 = vmatprep.subr.mxu0 0.0
  %1656 = vmatpush1.msra.mxu0 0.0
  %1657 = vmatprep.subr.mxu0 0.0
  %1658 = vmatpush1.msra.mxu0 0.0
  %1659 = vmatprep.subr.mxu0 0.0
  %1660 = vmatpush1.msra.mxu0 0.0
  %1661 = vmatprep.subr.mxu0 0.0
  %1662 = vmatpush1.msra.mxu0 0.0
  %1663 = vmatprep.subr.mxu0 0.0
  %1664 = vmatpush1.msra.mxu0 0.0
  %1665 = vmatprep.subr.mxu0 0.0
  %1666 = vmatpush1.msra.mxu0 0.0
  %1667 = vmatprep.subr.mxu0 0.0
  %1668 = vmatpush1.msra.mxu0 0.0
  %1669 = vmatprep.subr.mxu0 0.0
  %1670 = vmatpush1.msra.mxu0 0.0
  %1671 = vmatprep.subr.mxu0 0.0
  %1672 = vmatpush1.msra.mxu0 0.0
  %1673 = vmatprep.subr.mxu0 0.0
  %1674 = vmatpush1.msra.mxu0 0.0
  %1675 = vmatprep.subr.mxu0 0.0
  %1676 = vmatpush1.msra.mxu0 0.0
  %1677 = vmatprep.subr.mxu0 0.0
  %1678 = vmatpush1.msra.mxu0 %v1647
  %1679 = vmatprep.subr.mxu0 0.0
  %1680 = vmatpush1.msra.mxu0 %v1403
  %1681 = vmatprep.subr.mxu0 0.0
  %1682 = vmatpush2.msra.mxu0 0.0
  %1683 = vmatprep.subr.mxu0 0.0
  %1684 = vmatpush2.msra.mxu0 0.0
  %1685 = vmatprep.subr.mxu0 0.0
  %1686 = vmatpush2.msra.mxu0 0.0
  %1687 = vmatprep.subr.mxu0 0.0
  %1688 = vmatpush2.msra.mxu0 0.0
  %1689 = vmatprep.subr.mxu0 0.0
  %1690 = vmatpush2.msra.mxu0 0.0
  %1691 = vmatprep.subr.mxu0 0.0
  %1692 = vmatpush2.msra.mxu0 0.0
  %1693 = vmatprep.subr.mxu0 0.0
  %1694 = vmatpush2.msra.mxu0 0.0
  %1695 = vmatprep.subr.mxu0 0.0
  %1696 = vmatpush2.msra.mxu0 0.0
  %1697 = vmatprep.subr.mxu0 0.0
  %1698 = vmatpush2.msra.mxu0 0.0
  %1699 = vmatprep.subr.mxu0 0.0
  %1700 = vmatpush2.msra.mxu0 0.0
  %1701 = vmatprep.subr.mxu0 0.0
  %1702 = vmatpush2.msra.mxu0 0.0
  %1703 = vmatprep.subr.mxu0 0.0
  %1704 = vmatpush2.msra.mxu0 0.0
  %1705 = vmatprep.subr.mxu0 0.0
  %1706 = vmatpush2.msra.mxu0 0.0
  %1707 = vmatprep.subr.mxu0 0.0
  %1708 = vmatpush2.msra.mxu0 0.0
  %1709 = vmatprep.subr.mxu0 0.0
  %1710 = vmatpush2.msra.mxu0 0.0
  %1711 = vmatprep.subr.mxu0 0.0
  %1712 = vmatpush2.msra.mxu0 0.0
  %1713 = vmatprep.mubr.f32.mxu0 0.0
  %1714 = vmatmul.mubr.f32.gmra.mxu0 %v1425
  %v1715 = vpop.f32.mrf.mxu0
  %v1716 = vadd.f32 %v1423, %v1715
  %v1717 = vpop.f32.mrf.mxu0
  %1718 = vdwg.mxu0
  %v1720 = vsel %vm36, %v1406, 0
  %1722 = vmatprep.subr.mxu0 0.0
  %1723 = vmatpush1.msra.mxu0 0.0
  %1724 = vmatprep.subr.mxu0 0.0
  %1725 = vmatpush1.msra.mxu0 0.0
  %1726 = vmatprep.subr.mxu0 0.0
  %1727 = vmatpush1.msra.mxu0 0.0
  %1728 = vmatprep.subr.mxu0 0.0
  %1729 = vmatpush1.msra.mxu0 0.0
  %1730 = vmatprep.subr.mxu0 0.0
  %1731 = vmatpush1.msra.mxu0 0.0
  %1732 = vmatprep.subr.mxu0 0.0
  %1733 = vmatpush1.msra.mxu0 0.0
  %1734 = vmatprep.subr.mxu0 0.0
  %1735 = vmatpush1.msra.mxu0 0.0
  %1736 = vmatprep.subr.mxu0 0.0
  %1737 = vmatpush1.msra.mxu0 0.0
  %1738 = vmatprep.subr.mxu0 0.0
  %1739 = vmatpush1.msra.mxu0 0.0
  %1740 = vmatprep.subr.mxu0 0.0
  %1741 = vmatpush1.msra.mxu0 0.0
  %1742 = vmatprep.subr.mxu0 0.0
  %1743 = vmatpush1.msra.mxu0 0.0
  %1744 = vmatprep.subr.mxu0 0.0
  %1745 = vmatpush1.msra.mxu0 0.0
  %1746 = vmatprep.subr.mxu0 0.0
  %1747 = vmatpush1.msra.mxu0 0.0
  %1748 = vmatprep.subr.mxu0 0.0
  %1749 = vmatpush1.msra.mxu0 0.0
  %1750 = vmatprep.subr.mxu0 0.0
  %1751 = vmatpush1.msra.mxu0 %v1720
  %1752 = vmatprep.subr.mxu0 0.0
  %1753 = vmatpush1.msra.mxu0 %v1405
  %1754 = vmatprep.subr.mxu0 0.0
  %1755 = vmatpush2.msra.mxu0 0.0
  %1756 = vmatprep.subr.mxu0 0.0
  %1757 = vmatpush2.msra.mxu0 0.0
  %1758 = vmatprep.subr.mxu0 0.0
  %1759 = vmatpush2.msra.mxu0 0.0
  %1760 = vmatprep.subr.mxu0 0.0
  %1761 = vmatpush2.msra.mxu0 0.0
  %1762 = vmatprep.subr.mxu0 0.0
  %1763 = vmatpush2.msra.mxu0 0.0
  %1764 = vmatprep.subr.mxu0 0.0
  %1765 = vmatpush2.msra.mxu0 0.0
  %1766 = vmatprep.subr.mxu0 0.0
  %1767 = vmatpush2.msra.mxu0 0.0
  %1768 = vmatprep.subr.mxu0 0.0
  %1769 = vmatpush2.msra.mxu0 0.0
  %1770 = vmatprep.subr.mxu0 0.0
  %1771 = vmatpush2.msra.mxu0 0.0
  %1772 = vmatprep.subr.mxu0 0.0
  %1773 = vmatpush2.msra.mxu0 0.0
  %1774 = vmatprep.subr.mxu0 0.0
  %1775 = vmatpush2.msra.mxu0 0.0
  %1776 = vmatprep.subr.mxu0 0.0
  %1777 = vmatpush2.msra.mxu0 0.0
  %1778 = vmatprep.subr.mxu0 0.0
  %1779 = vmatpush2.msra.mxu0 0.0
  %1780 = vmatprep.subr.mxu0 0.0
  %1781 = vmatpush2.msra.mxu0 0.0
  %1782 = vmatprep.subr.mxu0 0.0
  %1783 = vmatpush2.msra.mxu0 0.0
  %1784 = vmatprep.subr.mxu0 0.0
  %1785 = vmatpush2.msra.mxu0 0.0
  %1786 = vmatprep.mubr.f32.mxu0 0.0
  %1787 = vmatmul.mubr.f32.gmra.mxu0 %v1425
  %v1788 = vpop.f32.mrf.mxu0
  %v1789 = vadd.f32 %v1423, %v1788
  %v1790 = vpop.f32.mrf.mxu0
  %1791 = vdwg.mxu0
  %v1793 = vsel %vm36, %v1408, 0
  %1795 = vmatprep.subr.mxu0 0.0
  %1796 = vmatpush1.msra.mxu0 0.0
  %1797 = vmatprep.subr.mxu0 0.0
  %1798 = vmatpush1.msra.mxu0 0.0
  %1799 = vmatprep.subr.mxu0 0.0
  %1800 = vmatpush1.msra.mxu0 0.0
  %1801 = vmatprep.subr.mxu0 0.0
  %1802 = vmatpush1.msra.mxu0 0.0
  %1803 = vmatprep.subr.mxu0 0.0
  %1804 = vmatpush1.msra.mxu0 0.0
  %1805 = vmatprep.subr.mxu0 0.0
  %1806 = vmatpush1.msra.mxu0 0.0
  %1807 = vmatprep.subr.mxu0 0.0
  %1808 = vmatpush1.msra.mxu0 0.0
  %1809 = vmatprep.subr.mxu0 0.0
  %1810 = vmatpush1.msra.mxu0 0.0
  %1811 = vmatprep.subr.mxu0 0.0
  %1812 = vmatpush1.msra.mxu0 0.0
  %1813 = vmatprep.subr.mxu0 0.0
  %1814 = vmatpush1.msra.mxu0 0.0
  %1815 = vmatprep.subr.mxu0 0.0
  %1816 = vmatpush1.msra.mxu0 0.0
  %1817 = vmatprep.subr.mxu0 0.0
  %1818 = vmatpush1.msra.mxu0 0.0
  %1819 = vmatprep.subr.mxu0 0.0
  %1820 = vmatpush1.msra.mxu0 0.0
  %1821 = vmatprep.subr.mxu0 0.0
  %1822 = vmatpush1.msra.mxu0 0.0
  %1823 = vmatprep.subr.mxu0 0.0
  %1824 = vmatpush1.msra.mxu0 %v1793
  %1825 = vmatprep.subr.mxu0 0.0
  %1826 = vmatpush1.msra.mxu0 %v1407
  %1827 = vmatprep.subr.mxu0 0.0
  %1828 = vmatpush2.msra.mxu0 0.0
  %1829 = vmatprep.subr.mxu0 0.0
  %1830 = vmatpush2.msra.mxu0 0.0
  %1831 = vmatprep.subr.mxu0 0.0
  %1832 = vmatpush2.msra.mxu0 0.0
  %1833 = vmatprep.subr.mxu0 0.0
  %1834 = vmatpush2.msra.mxu0 0.0
  %1835 = vmatprep.subr.mxu0 0.0
  %1836 = vmatpush2.msra.mxu0 0.0
  %1837 = vmatprep.subr.mxu0 0.0
  %1838 = vmatpush2.msra.mxu0 0.0
  %1839 = vmatprep.subr.mxu0 0.0
  %1840 = vmatpush2.msra.mxu0 0.0
  %1841 = vmatprep.subr.mxu0 0.0
  %1842 = vmatpush2.msra.mxu0 0.0
  %1843 = vmatprep.subr.mxu0 0.0
  %1844 = vmatpush2.msra.mxu0 0.0
  %1845 = vmatprep.subr.mxu0 0.0
  %1846 = vmatpush2.msra.mxu0 0.0
  %1847 = vmatprep.subr.mxu0 0.0
  %1848 = vmatpush2.msra.mxu0 0.0
  %1849 = vmatprep.subr.mxu0 0.0
  %1850 = vmatpush2.msra.mxu0 0.0
  %1851 = vmatprep.subr.mxu0 0.0
  %1852 = vmatpush2.msra.mxu0 0.0
  %1853 = vmatprep.subr.mxu0 0.0
  %1854 = vmatpush2.msra.mxu0 0.0
  %1855 = vmatprep.subr.mxu0 0.0
  %1856 = vmatpush2.msra.mxu0 0.0
  %1857 = vmatprep.subr.mxu0 0.0
  %1858 = vmatpush2.msra.mxu0 0.0
  %1859 = vmatprep.mubr.f32.mxu0 0.0
  %1860 = vmatmul.mubr.f32.gmra.mxu0 %v1425
  %v1861 = vpop.f32.mrf.mxu0
  %v1862 = vadd.f32 %v1423, %v1861
  %v1863 = vpop.f32.mrf.mxu0
  %1864 = vdwg.mxu0
  %v1866 = vsel %vm36, %v1410, 0
  %1868 = vmatprep.subr.mxu0 0.0
  %1869 = vmatpush1.msra.mxu0 0.0
  %1870 = vmatprep.subr.mxu0 0.0
  %1871 = vmatpush1.msra.mxu0 0.0
  %1872 = vmatprep.subr.mxu0 0.0
  %1873 = vmatpush1.msra.mxu0 0.0
  %1874 = vmatprep.subr.mxu0 0.0
  %1875 = vmatpush1.msra.mxu0 0.0
  %1876 = vmatprep.subr.mxu0 0.0
  %1877 = vmatpush1.msra.mxu0 0.0
  %1878 = vmatprep.subr.mxu0 0.0
  %1879 = vmatpush1.msra.mxu0 0.0
  %1880 = vmatprep.subr.mxu0 0.0
  %1881 = vmatpush1.msra.mxu0 0.0
  %1882 = vmatprep.subr.mxu0 0.0
  %1883 = vmatpush1.msra.mxu0 0.0
  %1884 = vmatprep.subr.mxu0 0.0
  %1885 = vmatpush1.msra.mxu0 0.0
  %1886 = vmatprep.subr.mxu0 0.0
  %1887 = vmatpush1.msra.mxu0 0.0
  %1888 = vmatprep.subr.mxu0 0.0
  %1889 = vmatpush1.msra.mxu0 0.0
  %1890 = vmatprep.subr.mxu0 0.0
  %1891 = vmatpush1.msra.mxu0 0.0
  %1892 = vmatprep.subr.mxu0 0.0
  %1893 = vmatpush1.msra.mxu0 0.0
  %1894 = vmatprep.subr.mxu0 0.0
  %1895 = vmatpush1.msra.mxu0 0.0
  %1896 = vmatprep.subr.mxu0 0.0
  %1897 = vmatpush1.msra.mxu0 %v1866
  %1898 = vmatprep.subr.mxu0 0.0
  %1899 = vmatpush1.msra.mxu0 %v1409
  %1900 = vmatprep.subr.mxu0 0.0
  %1901 = vmatpush2.msra.mxu0 0.0
  %1902 = vmatprep.subr.mxu0 0.0
  %1903 = vmatpush2.msra.mxu0 0.0
  %1904 = vmatprep.subr.mxu0 0.0
  %1905 = vmatpush2.msra.mxu0 0.0
  %1906 = vmatprep.subr.mxu0 0.0
  %1907 = vmatpush2.msra.mxu0 0.0
  %1908 = vmatprep.subr.mxu0 0.0
  %1909 = vmatpush2.msra.mxu0 0.0
  %1910 = vmatprep.subr.mxu0 0.0
  %1911 = vmatpush2.msra.mxu0 0.0
  %1912 = vmatprep.subr.mxu0 0.0
  %1913 = vmatpush2.msra.mxu0 0.0
  %1914 = vmatprep.subr.mxu0 0.0
  %1915 = vmatpush2.msra.mxu0 0.0
  %1916 = vmatprep.subr.mxu0 0.0
  %1917 = vmatpush2.msra.mxu0 0.0
  %1918 = vmatprep.subr.mxu0 0.0
  %1919 = vmatpush2.msra.mxu0 0.0
  %1920 = vmatprep.subr.mxu0 0.0
  %1921 = vmatpush2.msra.mxu0 0.0
  %1922 = vmatprep.subr.mxu0 0.0
  %1923 = vmatpush2.msra.mxu0 0.0
  %1924 = vmatprep.subr.mxu0 0.0
  %1925 = vmatpush2.msra.mxu0 0.0
  %1926 = vmatprep.subr.mxu0 0.0
  %1927 = vmatpush2.msra.mxu0 0.0
  %1928 = vmatprep.subr.mxu0 0.0
  %1929 = vmatpush2.msra.mxu0 0.0
  %1930 = vmatprep.subr.mxu0 0.0
  %1931 = vmatpush2.msra.mxu0 0.0
  %1932 = vmatprep.mubr.f32.mxu0 0.0
  %1933 = vmatmul.mubr.f32.gmra.mxu0 %v1425
  %v1934 = vpop.f32.mrf.mxu0
  %v1935 = vadd.f32 %v1423, %v1934
  %v1936 = vpop.f32.mrf.mxu0
  %1937 = vdwg.mxu0
  %v1939 = vsel %vm36, %v1412, 0
  %1941 = vmatprep.subr.mxu0 0.0
  %1942 = vmatpush1.msra.mxu0 0.0
  %1943 = vmatprep.subr.mxu0 0.0
  %1944 = vmatpush1.msra.mxu0 0.0
  %1945 = vmatprep.subr.mxu0 0.0
  %1946 = vmatpush1.msra.mxu0 0.0
  %1947 = vmatprep.subr.mxu0 0.0
  %1948 = vmatpush1.msra.mxu0 0.0
  %1949 = vmatprep.subr.mxu0 0.0
  %1950 = vmatpush1.msra.mxu0 0.0
  %1951 = vmatprep.subr.mxu0 0.0
  %1952 = vmatpush1.msra.mxu0 0.0
  %1953 = vmatprep.subr.mxu0 0.0
  %1954 = vmatpush1.msra.mxu0 0.0
  %1955 = vmatprep.subr.mxu0 0.0
  %1956 = vmatpush1.msra.mxu0 0.0
  %1957 = vmatprep.subr.mxu0 0.0
  %1958 = vmatpush1.msra.mxu0 0.0
  %1959 = vmatprep.subr.mxu0 0.0
  %1960 = vmatpush1.msra.mxu0 0.0
  %1961 = vmatprep.subr.mxu0 0.0
  %1962 = vmatpush1.msra.mxu0 0.0
  %1963 = vmatprep.subr.mxu0 0.0
  %1964 = vmatpush1.msra.mxu0 0.0
  %1965 = vmatprep.subr.mxu0 0.0
  %1966 = vmatpush1.msra.mxu0 0.0
  %1967 = vmatprep.subr.mxu0 0.0
  %1968 = vmatpush1.msra.mxu0 0.0
  %1969 = vmatprep.subr.mxu0 0.0
  %1970 = vmatpush1.msra.mxu0 %v1939
  %1971 = vmatprep.subr.mxu0 0.0
  %1972 = vmatpush1.msra.mxu0 %v1411
  %1973 = vmatprep.subr.mxu0 0.0
  %1974 = vmatpush2.msra.mxu0 0.0
  %1975 = vmatprep.subr.mxu0 0.0
  %1976 = vmatpush2.msra.mxu0 0.0
  %1977 = vmatprep.subr.mxu0 0.0
  %1978 = vmatpush2.msra.mxu0 0.0
  %1979 = vmatprep.subr.mxu0 0.0
  %1980 = vmatpush2.msra.mxu0 0.0
  %1981 = vmatprep.subr.mxu0 0.0
  %1982 = vmatpush2.msra.mxu0 0.0
  %1983 = vmatprep.subr.mxu0 0.0
  %1984 = vmatpush2.msra.mxu0 0.0
  %1985 = vmatprep.subr.mxu0 0.0
  %1986 = vmatpush2.msra.mxu0 0.0
  %1987 = vmatprep.subr.mxu0 0.0
  %1988 = vmatpush2.msra.mxu0 0.0
  %1989 = vmatprep.subr.mxu0 0.0
  %1990 = vmatpush2.msra.mxu0 0.0
  %1991 = vmatprep.subr.mxu0 0.0
  %1992 = vmatpush2.msra.mxu0 0.0
  %1993 = vmatprep.subr.mxu0 0.0
  %1994 = vmatpush2.msra.mxu0 0.0
  %1995 = vmatprep.subr.mxu0 0.0
  %1996 = vmatpush2.msra.mxu0 0.0
  %1997 = vmatprep.subr.mxu0 0.0
  %1998 = vmatpush2.msra.mxu0 0.0
  %1999 = vmatprep.subr.mxu0 0.0
  %2000 = vmatpush2.msra.mxu0 0.0
  %2001 = vmatprep.subr.mxu0 0.0
  %2002 = vmatpush2.msra.mxu0 0.0
  %2003 = vmatprep.subr.mxu0 0.0
  %2004 = vmatpush2.msra.mxu0 0.0
  %2005 = vmatprep.mubr.f32.mxu0 0.0
  %2006 = vmatmul.mubr.f32.gmra.mxu0 %v1425
  %v2007 = vpop.f32.mrf.mxu0
  %v2008 = vadd.f32 %v1423, %v2007
  %v2009 = vpop.f32.mrf.mxu0
  %2010 = vdwg.mxu0
  %v2019 = vrot.slane %v1570, 7
  %vm2020 = vcmask 1041409
  %v2021 = vsel %vm2020, %v2019, %v1497
  %v2022 = vrot.slane %v1643, 6
  %vm2023 = vcmask 1042434
  %v2024 = vsel %vm2023, %v2022, %v2021
  %v2025 = vrot.slane %v1716, 5
  %vm2026 = vcmask 1043459
  %v2027 = vsel %vm2026, %v2025, %v2024
  %v2028 = vrot.slane %v1789, 4
  %vm2029 = vcmask 1044484
  %v2030 = vsel %vm2029, %v2028, %v2027
  %v2031 = vrot.slane %v1862, 3
  %vm2032 = vcmask 1045509
  %v2033 = vsel %vm2032, %v2031, %v2030
  %v2034 = vrot.slane %v1935, 2
  %vm2035 = vcmask 1046534
  %v2036 = vsel %vm2035, %v2034, %v2033
  %v2037 = vrot.slane %v2008, 1
  %vm2038 = vcmask 1047559
  %v2039 = vsel %vm2038, %v2037, %v2036
  %2041 = vst [vmem:[%s6] sm:$0xff] %v2039
  // Predicated region
  $region26: #{hedge_forward.1} parent=0 // pred_check
    _
  $region27: #{hedge_forward.1} parent=0 // pred_check_branch
    %2043 = sbr.rel (0) target = $region29
  $region28: #{hedge_forward.1} parent=0 // pred_region
    _
  $region29: #{hedge_forward.1} parent=0 // pred_fallthru
    _
  // Predicated region
  $region30: #{hedge_forward.1} parent=0 // pred_check
    _
  $region31: #{hedge_forward.1} parent=0 // pred_check_branch
    %2045 = sbr.rel (0) target = $region33
  $region32: #{hedge_forward.1} parent=0 // pred_region
    _
  $region33: #{hedge_forward.1} parent=0 // pred_fallthru
    _

</llo_original>
